<compile_context>
chip_gen: v6e
topology: v6e:2x2x1
jax: 0.10.0
libtpu: 0.0.40
codegen_flags: <defaults>
</compile_context>

<pallas_src>
import functools

import jax
import jax.numpy as jnp
import numpy as np
from jax import lax
from jax.experimental import pallas as pl
from jax.experimental.pallas import tpu as pltpu

_EPS = 1e-5
_LANES = 128


# ----------------------------------------------------------------------------
# Tiling helpers.
# ----------------------------------------------------------------------------
def _sublane_multiple(dtype) -> int:
    """Sublane packing: 8 for 4-byte, 16 for 2-byte, 32 for 1-byte dtypes."""
    itemsize = jnp.dtype(dtype).itemsize
    return max(8, 32 // max(itemsize, 1))


def _vmem_budget_bytes() -> int:
    """Budget for the double-buffered in+out blocks (4 block-sized buffers)."""
    try:
        cap = pltpu.get_tpu_info().vmem_capacity_bytes
    except Exception:
        cap = 64 << 20
    # Stay well under the smallest scoped-VMEM default (16 MiB on v5e); the
    # f32 compute intermediates also need room.
    return min(cap // 8, 4 << 20)


def _pick_row_tile(n_rows: int, row_bytes: int, dtype) -> int:
    mult = _sublane_multiple(dtype)
    if n_rows <= mult:
        return n_rows                                   # single full-extent block
    budget = _vmem_budget_bytes()
    by_budget = max(mult, budget // (4 * row_bytes))    # in+out, double-buffered
    by_split = max(mult, -(-n_rows // 2))               # >= 2 grid steps (v7x megacore)
    tile = min(n_rows, by_budget, by_split)
    return max(mult, (tile // mult) * mult)


# ----------------------------------------------------------------------------
# Kernels.
# ----------------------------------------------------------------------------
def _ln_packed_kernel(x_ref, w_ref, seg_ref, o_ref, *, inv_c):
    """Lane-packed path: each 128-lane row holds 128/C original rows of C chans."""
    x = x_ref[...].astype(jnp.float32)          # (tile, 128)  lane-dense
    w = w_ref[...].astype(jnp.float32)          # (1, 128)     weight tiled per segment
    seg = seg_ref[...]                          # (128, 128)   0/1 segment-sum matrix

    # Segment sums over the C-wide channel groups packed along the lane axis.
    # 0/1 weights + HIGHEST precision -> exact f32 sums on the MXU; results are
    # already broadcast back across each segment's lanes.
    s1 = jnp.dot(x, seg, preferred_element_type=jnp.float32,
                 precision=lax.Precision.HIGHEST)
    s2 = jnp.dot(x * x, seg, preferred_element_type=jnp.float32,
                 precision=lax.Precision.HIGHEST)

    mean = s1 * inv_c
    var = jnp.maximum(s2 * inv_c - mean * mean, 0.0)    # one-pass var, clamped
    inv_sigma = lax.rsqrt(var + jnp.float32(_EPS))      # EUP rsqrt, no divide
    # Bias-free: scale the *original* x, not the mean-subtracted x.
    o_ref[...] = (x * inv_sigma * w).astype(o_ref.dtype)


def _ln_generic_kernel(x_ref, w_ref, o_ref):
    """Fallback path for arbitrary C (C >= 128 is already lane-dense here)."""
    x = x_ref[...].astype(jnp.float32)          # (tile, C)
    w = w_ref[...].astype(jnp.float32)          # (1, C)
    mean = jnp.mean(x, axis=-1, keepdims=True)
    xm = x - mean
    var = jnp.mean(xm * xm, axis=-1, keepdims=True)
    inv_sigma = lax.rsqrt(var + jnp.float32(_EPS))
    o_ref[...] = (x * inv_sigma * w).astype(o_ref.dtype)


# ----------------------------------------------------------------------------
# Wrapper: normalize over the last dim of an arbitrary-rank input.
# ----------------------------------------------------------------------------
def biasfree_layernorm(x, weight):
    """x: (..., C), weight: (C,).  Returns same shape/dtype as x."""
    orig_shape = x.shape
    C = int(orig_shape[-1])
    N = int(np.prod(orig_shape[:-1], dtype=np.int64))
    itemsize = jnp.dtype(x.dtype).itemsize

    compiler_params = pltpu.CompilerParams(
        dimension_semantics=("parallel",),
        vmem_limit_bytes=32 * 1024 * 1024)

    can_pack = (C < _LANES) and (_LANES % C == 0) and ((N * C) % _LANES == 0)

    if can_pack:
        # ---- lane-dense packed path -----------------------------------------
        G = _LANES // C                         # original rows per packed row
        M = (N * C) // _LANES                   # packed rows
        x2 = x.reshape(M, _LANES)               # free view of the contiguous slab
        w2 = jnp.tile(weight.reshape(1, C), (1, G))          # (1, 128)
        lane = jnp.arange(_LANES)
        seg = (lane[:, None] // C == lane[None, :] // C).astype(jnp.float32)

        tile = _pick_row_tile(M, _LANES * itemsize, x.dtype)
        grid = (pl.cdiv(M, tile),)

        cost = pl.CostEstimate(
            flops=int(2 * 2 * M * _LANES * _LANES + 8 * N * C),
            transcendentals=int(N),
            bytes_accessed=int(2 * N * C * itemsize + C * itemsize))

        y = pl.pallas_call(
            functools.partial(_ln_packed_kernel, inv_c=float(1.0 / C)),
            out_shape=jax.ShapeDtypeStruct((M, _LANES), x.dtype),
            grid=grid,
            in_specs=[
                pl.BlockSpec((tile, _LANES), lambda i: (i, 0)),
                pl.BlockSpec((1, _LANES), lambda i: (0, 0)),        # fetched once
                pl.BlockSpec((_LANES, _LANES), lambda i: (0, 0)),   # fetched once
            ],
            out_specs=pl.BlockSpec((tile, _LANES), lambda i: (i, 0)),
            compiler_params=compiler_params,
            cost_estimate=cost,
        )(x2, w2, seg)
        return y.reshape(orig_shape)

    # ---- generic fallback path ----------------------------------------------
    x2 = x.reshape(N, C)
    w2 = weight.reshape(1, C)
    tile = _pick_row_tile(N, C * itemsize, x.dtype)
    grid = (pl.cdiv(N, tile),)

    cost = pl.CostEstimate(
        flops=int(8 * N * C),
        transcendentals=int(N),
        bytes_accessed=int(2 * N * C * itemsize + C * itemsize))

    y = pl.pallas_call(
        _ln_generic_kernel,
        out_shape=jax.ShapeDtypeStruct((N, C), x.dtype),
        grid=grid,
        in_specs=[
            pl.BlockSpec((tile, C), lambda i: (i, 0)),
            pl.BlockSpec((1, C), lambda i: (0, 0)),                 # fetched once
        ],
        out_specs=pl.BlockSpec((tile, C), lambda i: (i, 0)),
        compiler_params=compiler_params,
        cost_estimate=cost,
    )(x2, w2)
    return y.reshape(orig_shape)


# ----------------------------------------------------------------------------
# Pure-JAX reference for verification.
# ----------------------------------------------------------------------------
def reference_forward(x, weight):
    sigma = jnp.var(x, axis=-1, keepdims=True)          # ddof=0 == unbiased=False
    return x / jnp.sqrt(sigma + 1e-5) * weight


# ----------------------------------------------------------------------------
if __name__ == "__main__":
    key = jax.random.PRNGKey(0)
    kx, kw, kx2, kw2 = jax.random.split(key, 4)

    # Restormer-style usage: (B, H*W, C) tokens, bias-free LN over C=32.
    B, HW, C = 2, 16 * 16, 32
    x = jax.random.normal(kx, (B, HW, C), dtype=jnp.float32)
    weight = 1.0 + 0.1 * jax.random.normal(kw, (C,), dtype=jnp.float32)

    fwd = jax.jit(biasfree_layernorm)
    out = jax.block_until_ready(fwd(x, weight))
    ref = reference_forward(x, weight)
    np.testing.assert_allclose(np.asarray(out), np.asarray(ref),
                               rtol=1e-5, atol=1e-5)

    # Also exercise the generic fallback path (C not lane-packable).
    xg = jax.random.normal(kx2, (4, 64, 96), dtype=jnp.float32)
    wg = 1.0 + 0.1 * jax.random.normal(kw2, (96,), dtype=jnp.float32)
    outg = jax.block_until_ready(jax.jit(biasfree_layernorm)(xg, wg))
    refg = reference_forward(xg, wg)
    np.testing.assert_allclose(np.asarray(outg), np.asarray(refg),
                               rtol=1e-5, atol=1e-5)

    print("KERNEL_OK")
</pallas_src>

<mosaic_0001>
module attributes {stable_mosaic.version = 11 : i64} {
  func.func @_ln_packed_kernel(%arg0: i32, %arg1: memref<64x128xf32, #tpu.memory_space<vmem>>, %arg2: memref<1x128xf32, #tpu.memory_space<vmem>>, %arg3: memref<128x128xf32, #tpu.memory_space<vmem>>, %arg4: memref<64x128xf32, #tpu.memory_space<vmem>>) attributes {dimension_semantics = [#tpu.dimension_semantics<parallel>], iteration_bounds = array<i64: 2>, scalar_prefetch = 0 : i64, scratch_operands = 0 : i64, tpu.core_type = #tpu.core_type<tc>, window_params = [{transform_indices = @transform_0, window_bounds = array<i64: 64, 128>}, {pipeline_mode = #tpu.pipeline_mode<synchronous>, transform_indices = @transform_1, window_bounds = array<i64: 1, 128>}, {pipeline_mode = #tpu.pipeline_mode<synchronous>, transform_indices = @transform_2, window_bounds = array<i64: 128, 128>}, {transform_indices = @transform_3, window_bounds = array<i64: 64, 128>}]} {
    %c0 = arith.constant 0 : index
    %c0_0 = arith.constant 0 : index
    %0 = vector.load %arg1[%c0, %c0_0] : memref<64x128xf32, #tpu.memory_space<vmem>>, vector<64x128xf32>
    %c0_1 = arith.constant 0 : index
    %c0_2 = arith.constant 0 : index
    %1 = vector.load %arg2[%c0_1, %c0_2] : memref<1x128xf32, #tpu.memory_space<vmem>>, vector<1x128xf32>
    %c0_3 = arith.constant 0 : index
    %c0_4 = arith.constant 0 : index
    %2 = vector.load %arg3[%c0_3, %c0_4] : memref<128x128xf32, #tpu.memory_space<vmem>>, vector<128x128xf32>
    %cst = arith.constant dense<0.000000e+00> : vector<64x128xf32>
    %3 = tpu.matmul %0, %2, %cst {dimension_numbers = #tpu.dot_dimension_numbers<[1], [0], [0], [1], [0, 0, 1, 1], [], []>, precision = #tpu.contract_precision<fp32>} : vector<64x128xf32>, vector<128x128xf32>, vector<64x128xf32> -> vector<64x128xf32>
    %4 = arith.mulf %0, %0 : vector<64x128xf32>
    %cst_5 = arith.constant dense<0.000000e+00> : vector<64x128xf32>
    %5 = tpu.matmul %4, %2, %cst_5 {dimension_numbers = #tpu.dot_dimension_numbers<[1], [0], [0], [1], [0, 0, 1, 1], [], []>, precision = #tpu.contract_precision<fp32>} : vector<64x128xf32>, vector<128x128xf32>, vector<64x128xf32> -> vector<64x128xf32>
    %cst_6 = arith.constant 3.125000e-02 : f32
    %6 = vector.broadcast %cst_6 : f32 to vector<64x128xf32>
    %7 = arith.mulf %3, %6 : vector<64x128xf32>
    %cst_7 = arith.constant 3.125000e-02 : f32
    %8 = vector.broadcast %cst_7 : f32 to vector<64x128xf32>
    %9 = arith.mulf %5, %8 : vector<64x128xf32>
    %10 = arith.mulf %7, %7 : vector<64x128xf32>
    %11 = arith.subf %9, %10 : vector<64x128xf32>
    %cst_8 = arith.constant 0.000000e+00 : f32
    %12 = vector.broadcast %cst_8 : f32 to vector<64x128xf32>
    %13 = arith.maximumf %11, %12 : vector<64x128xf32>
    %cst_9 = arith.constant 9.99999974E-6 : f32
    %14 = vector.broadcast %cst_9 : f32 to vector<64x128xf32>
    %15 = arith.addf %13, %14 : vector<64x128xf32>
    %16 = math.rsqrt %15 : vector<64x128xf32>
    %17 = arith.mulf %0, %16 : vector<64x128xf32>
    %18 = vector.broadcast %1 : vector<1x128xf32> to vector<64x128xf32>
    %19 = arith.mulf %17, %18 : vector<64x128xf32>
    %c0_10 = arith.constant 0 : index
    %c0_11 = arith.constant 0 : index
    %20 = vector.load %arg4[%c0_10, %c0_11] : memref<64x128xf32, #tpu.memory_space<vmem>>, vector<64x128xf32>
    tpu.vector_store %arg4[%c0_10, %c0_11], %19 {strides = array<i32>} : memref<64x128xf32, #tpu.memory_space<vmem>>, vector<64x128xf32>,
    return
  }
  func.func @transform_0(%arg0: i32) -> (i32, i32) {
    %c0_i32 = arith.constant 0 : i32
    %c0_i32_0 = arith.constant 0 : i32
    return %arg0, %c0_i32 : i32, i32
  }
  func.func @transform_1(%arg0: i32) -> (i32, i32) {
    %c0_i32 = arith.constant 0 : i32
    %c0_i32_0 = arith.constant 0 : i32
    %c0_i32_1 = arith.constant 0 : i32
    return %c0_i32, %c0_i32_0 : i32, i32
  }
  func.func @transform_2(%arg0: i32) -> (i32, i32) {
    %c0_i32 = arith.constant 0 : i32
    %c0_i32_0 = arith.constant 0 : i32
    %c0_i32_1 = arith.constant 0 : i32
    return %c0_i32, %c0_i32_0 : i32, i32
  }
  func.func @transform_3(%arg0: i32) -> (i32, i32) {
    %c0_i32 = arith.constant 0 : i32
    %c0_i32_0 = arith.constant 0 : i32
    return %arg0, %c0_i32 : i32, i32
  }
}

</mosaic_0001>

<llo_original>
// kernel: biasfree_layernorm.1
$region0: #{biasfree_layernorm.1}
  #allocation0 [shape = 'u32[]', space=smem, size = 0x4, offset = 0x4, fixed_abs, tag = 'smem constant byte address 0x4 - core index']
  #allocation1 [shape = 'u32[144,128]{1,0:T(1,128)}', space=vmem, size = 0x12000, scoped, tag = 'internal scratch']
  %s0 = inlined_call_operand.vmem [shape: f32[128,128], index: 0, kind: input, shape index: {}]
  %s1 = inlined_call_operand.vmem [shape: f32[1,128], index: 1, kind: input, shape index: {}]
  %s2 = inlined_call_operand.vmem [shape: f32[128,128], index: 2, kind: input, shape index: {}]
  %s3 = inlined_call_operand.vmem [shape: f32[128,128], index: 3, kind: output, shape index: {}]
  %s4 = sld [smem:[#allocation0]]
  $region45: #{biasfree_layernorm.1} parent=0
    _
  %s6 = ssub.s32 1, %s4
  %s7 = scalar_select 0, %s6, %s4
  loop: start=0, step=1, limit=4
  $region2: #{biasfree_layernorm.1} parent=0 // loop_pre_header
    _
  $region3: #{biasfree_layernorm.1} parent=0 // loop_header
    %s9 = sphi 0, %s13
    %p10 = scmp.ge.s32.totalorder %s9, 4
    %s19 = sphi 0, %s21
    %s22 = sphi 0, %s19
    %s23 = sphi 0, %s22
    %s39 = sphi 0, %s23
    %s43 = sphi 0, %s43
    %s45 = sphi 0, %s43
    %s46 = sphi 0, %s45
    %s60 = sphi 0, %s46
    %s64 = sphi 0, %s64
    %s66 = sphi 0, %s64
    %s67 = sphi 0, %s66
    %s81 = sphi 0, %s67
    %s87 = sphi 0, %s89
    %s90 = sphi 0, %s87
    %s91 = sphi 0, %s90
    %s107 = sphi 0, %s91
  $region4: #{biasfree_layernorm.1} parent=0 // loop_header_branch
    %12 = sbr.rel (%p10) target = $region8
  $region5: #{biasfree_layernorm.1} parent=0 // loop_body
    %s14 = ssub.s32 %s9, 1
    %s15 = ssub.s32 %s9, 2
    %s16 = sadd.s32 %s9, 1
    %s17 = ssub.s32 %s9, %s16
    %p18 = scmp.eq.s32.totalorder %s17, 0
    %s20 = sadd.s32 %s19, 1
    %s21 = scalar_select %p18, %s19, %s20
    %p24 = pneg %p18
    %p25 = scmp.eq.s32.totalorder %s9, 1
    %p26 = por %p24, %p25
    %p27 = scmp.ne.s32.totalorder %s19, %s22
    %p28 = scmp.eq.s32.totalorder %s9, 0
    %p29 = por %p27, %p28
    %p30 = scmp.ne.s32.totalorder %s19, %s22
    %p31 = scmp.eq.s32.totalorder %s14, 1
    %p32 = por %p30, %p31
    %p33 = scmp.ne.s32.totalorder %s22, %s23
    %p34 = scmp.eq.s32.totalorder %s14, 0
    %p35 = por %p33, %p34
    %p36 = scmp.ne.s32.totalorder %s22, %s23
    %p37 = scmp.eq.s32.totalorder %s15, 1
    %p38 = por %p36, %p37
    %p40 = scmp.ne.s32.totalorder %s23, %s39
    %p41 = scmp.eq.s32.totalorder %s15, 0
    %p42 = por %p40, %p41
    %s44 = sadd.s32 %s43, 1
    %p47 = scmp.eq.s32.totalorder %s9, 1
    %p48 = scmp.ne.s32.totalorder %s43, %s45
    %p49 = scmp.eq.s32.totalorder %s9, 0
    %p50 = por %p48, %p49
    %p51 = scmp.ne.s32.totalorder %s43, %s45
    %p52 = scmp.eq.s32.totalorder %s14, 1
    %p53 = por %p51, %p52
    %p54 = scmp.ne.s32.totalorder %s45, %s46
    %p55 = scmp.eq.s32.totalorder %s14, 0
    %p56 = por %p54, %p55
    %p57 = scmp.ne.s32.totalorder %s45, %s46
    %p58 = scmp.eq.s32.totalorder %s15, 1
    %p59 = por %p57, %p58
    %p61 = scmp.ne.s32.totalorder %s46, %s60
    %p62 = scmp.eq.s32.totalorder %s15, 0
    %p63 = por %p61, %p62
    %s65 = sadd.s32 %s64, 1
    %p68 = scmp.eq.s32.totalorder %s9, 1
    %p69 = scmp.ne.s32.totalorder %s64, %s66
    %p70 = scmp.eq.s32.totalorder %s9, 0
    %p71 = por %p69, %p70
    %p72 = scmp.ne.s32.totalorder %s64, %s66
    %p73 = scmp.eq.s32.totalorder %s14, 1
    %p74 = por %p72, %p73
    %p75 = scmp.ne.s32.totalorder %s66, %s67
    %p76 = scmp.eq.s32.totalorder %s14, 0
    %p77 = por %p75, %p76
    %p78 = scmp.ne.s32.totalorder %s66, %s67
    %p79 = scmp.eq.s32.totalorder %s15, 1
    %p80 = por %p78, %p79
    %p82 = scmp.ne.s32.totalorder %s67, %s81
    %p83 = scmp.eq.s32.totalorder %s15, 0
    %p84 = por %p82, %p83
    %s85 = ssub.s32 %s9, %s16
    %p86 = scmp.eq.s32.totalorder %s85, 0
    %s88 = sadd.s32 %s87, 1
    %s89 = scalar_select %p86, %s87, %s88
    %p92 = pneg %p86
    %p93 = scmp.eq.s32.totalorder %s9, 1
    %p94 = por %p92, %p93
    %p95 = scmp.ne.s32.totalorder %s87, %s90
    %p96 = scmp.eq.s32.totalorder %s9, 0
    %p97 = por %p95, %p96
    %p98 = scmp.ne.s32.totalorder %s87, %s90
    %p99 = scmp.eq.s32.totalorder %s14, 1
    %p100 = por %p98, %p99
    %p101 = scmp.ne.s32.totalorder %s90, %s91
    %p102 = scmp.eq.s32.totalorder %s14, 0
    %p103 = por %p101, %p102
    %p104 = scmp.ne.s32.totalorder %s90, %s91
    %p105 = scmp.eq.s32.totalorder %s15, 1
    %p106 = por %p104, %p105
    %p108 = scmp.ne.s32.totalorder %s91, %s107
    %p109 = scmp.eq.s32.totalorder %s15, 0
    %p110 = por %p108, %p109
    %p111 = scmp.le.s32.totalorder 1, %s9
    %p112 = scmp.lt.s32.totalorder %s9, 3
    %p113 = pnand %p111, %p112
    %p114 = pneg %p113
    // Predicated region
    $region9: #{biasfree_layernorm.1} parent=5 // pred_check
      _
    $region10: #{biasfree_layernorm.1} parent=5 // pred_check_branch
      %116 = sbr.rel (%p113) target = $region12
    $region11: #{biasfree_layernorm.1} parent=5 // pred_region
      %s117 = ssub.s32 %s9, 1
      // Predicated region
      $region13: #{biasfree_layernorm.1} parent=11 // pred_check
        %p118 = pneg %p56
      $region14: #{biasfree_layernorm.1} parent=11 // pred_check_branch
        %120 = sbr.rel (%p118) target = $region16
      $region15: #{biasfree_layernorm.1} parent=11 // pred_region
        _
      $region16: #{biasfree_layernorm.1} parent=11 // pred_fallthru
        _
      // Predicated region
      $region17: #{biasfree_layernorm.1} parent=11 // pred_check
        %p121 = pneg %p77
      $region18: #{biasfree_layernorm.1} parent=11 // pred_check_branch
        %123 = sbr.rel (%p121) target = $region20
      $region19: #{biasfree_layernorm.1} parent=11 // pred_region
        _
      $region20: #{biasfree_layernorm.1} parent=11 // pred_fallthru
        _
    $region12: #{biasfree_layernorm.1} parent=5 // pred_fallthru
      _
    %p124 = scmp.lt.s32.totalorder %s9, 2
    // Predicated region
    $region21: #{biasfree_layernorm.1} parent=5 // pred_check
      %p125 = pneg %p124
    $region22: #{biasfree_layernorm.1} parent=5 // pred_check_branch
      %127 = sbr.rel (%p125) target = $region24
    $region23: #{biasfree_layernorm.1} parent=5 // pred_region
      // Predicated region
      $region25: #{biasfree_layernorm.1} parent=23 // pred_check
        %p128 = pneg %p29
      $region26: #{biasfree_layernorm.1} parent=23 // pred_check_branch
        %130 = sbr.rel (%p128) target = $region28
      $region27: #{biasfree_layernorm.1} parent=23 // pred_region
        %s131 = smul.u32 8, %s9
        %p132 = scmp.lt.s32.totalorder %s131, 15
        %s133 = scalar_select %p132, %s131, 15
        %s134 = smul.addr %s133, 8
        %s135 = scalar_lea.vmem %s0, %s134
        %s136 = smul.u32 8, %s9
      $region28: #{biasfree_layernorm.1} parent=23 // pred_fallthru
        _
    $region24: #{biasfree_layernorm.1} parent=5 // pred_fallthru
      _
    %p137 = scmp.le.s32.totalorder 1, %s9
    %p138 = scmp.lt.s32.totalorder %s9, 3
    %p139 = pnand %p137, %p138
    %p140 = pneg %p139
    // Predicated region
    $region29: #{biasfree_layernorm.1} parent=5 // pred_check
      _
    $region30: #{biasfree_layernorm.1} parent=5 // pred_check_branch
      %142 = sbr.rel (%p139) target = $region32
    $region31: #{biasfree_layernorm.1} parent=5 // pred_region
      %s143 = ssub.s32 %s9, 1
      %s144 = smul.u32 8, %s14
      %p145 = scmp.lt.s32.totalorder %s144, 15
      %s146 = scalar_select %p145, %s144, 15
      %s147 = smul.addr %s146, 8
      %s148 = scalar_lea.vmem %s0, %s147
      %p149 = pneg %p35
      %p150 = pneg %p32
      %p151 = pneg %p56
      %p152 = pneg %p53
      %p153 = pneg %p77
      %p154 = pneg %p74
      %p155 = pneg %p103
      %p156 = pneg %p100
      %s157 = smul.u32 8, %s14
      %p158 = scmp.lt.s32.totalorder %s157, 15
      %s159 = scalar_select %p158, %s157, 15
      %s160 = smul.addr %s159, 8
      %s161 = scalar_lea.vmem %s3, %s160
      %s162 = smul.u32 8, %s14
      %p163 = scmp.lt.s32.totalorder %s162, 15
      %s164 = scalar_select %p163, %s162, 15
      %s165 = smul.addr %s164, 8
      %s166 = scalar_lea.vmem %s0, %s165
      %s167 = smul.u32 8, %s14
      %s168 = smul.u32 8, %s14
      %p169 = scmp.lt.s32.totalorder %s168, 15
      %s170 = scalar_select %p169, %s168, 15
      %s171 = smul.addr %s170, 8
      %s172 = scalar_lea.vmem %s3, %s171
      %s173 = smul.u32 8, %s14
      %v174 = vld [vmem:[%s166] sm:$0xff]
      %v175 = vld [vmem:[%s166 + $0x8] sm:$0xff]
      %v176 = vld [vmem:[%s166 + $0x10] sm:$0xff]
      %v177 = vld [vmem:[%s166 + $0x18] sm:$0xff]
      %v178 = vld [vmem:[%s166 + $0x20] sm:$0xff]
      %v179 = vld [vmem:[%s166 + $0x28] sm:$0xff]
      %v180 = vld [vmem:[%s166 + $0x30] sm:$0xff]
      %v181 = vld [vmem:[%s166 + $0x38] sm:$0xff]
      %v182 = vld [vmem:[%s1] sm:$0x1]
      %v183 = vld [vmem:[%s2] sm:$0xff]
      %v184 = vld [vmem:[%s2 + $0x8] sm:$0xff]
      %v185 = vld [vmem:[%s2 + $0x10] sm:$0xff]
      %v186 = vld [vmem:[%s2 + $0x18] sm:$0xff]
      %v187 = vld [vmem:[%s2 + $0x20] sm:$0xff]
      %v188 = vld [vmem:[%s2 + $0x28] sm:$0xff]
      %v189 = vld [vmem:[%s2 + $0x30] sm:$0xff]
      %v190 = vld [vmem:[%s2 + $0x38] sm:$0xff]
      %v191 = vld [vmem:[%s2 + $0x40] sm:$0xff]
      %v192 = vld [vmem:[%s2 + $0x48] sm:$0xff]
      %v193 = vld [vmem:[%s2 + $0x50] sm:$0xff]
      %v194 = vld [vmem:[%s2 + $0x58] sm:$0xff]
      %v195 = vld [vmem:[%s2 + $0x60] sm:$0xff]
      %v196 = vld [vmem:[%s2 + $0x68] sm:$0xff]
      %v197 = vld [vmem:[%s2 + $0x70] sm:$0xff]
      %v198 = vld [vmem:[%s2 + $0x78] sm:$0xff]
      %199 = vmatprep.subr.mxu0 0.0
      %v200 = vand.u32 %v198, 4294901760
      %201 = vmatpush1.msra.mxu0 %v200
      %202 = vmatprep.subr.mxu0 0.0
      %v203 = vand.u32 %v197, 4294901760
      %204 = vmatpush1.msra.mxu0 %v203
      %205 = vmatprep.subr.mxu0 0.0
      %v206 = vand.u32 %v196, 4294901760
      %207 = vmatpush1.msra.mxu0 %v206
      %208 = vmatprep.subr.mxu0 0.0
      %v209 = vand.u32 %v195, 4294901760
      %210 = vmatpush1.msra.mxu0 %v209
      %211 = vmatprep.subr.mxu0 0.0
      %v212 = vand.u32 %v194, 4294901760
      %213 = vmatpush1.msra.mxu0 %v212
      %214 = vmatprep.subr.mxu0 0.0
      %v215 = vand.u32 %v193, 4294901760
      %216 = vmatpush1.msra.mxu0 %v215
      %217 = vmatprep.subr.mxu0 0.0
      %v218 = vand.u32 %v192, 4294901760
      %219 = vmatpush1.msra.mxu0 %v218
      %220 = vmatprep.subr.mxu0 0.0
      %v221 = vand.u32 %v191, 4294901760
      %222 = vmatpush1.msra.mxu0 %v221
      %223 = vmatprep.subr.mxu0 0.0
      %v224 = vand.u32 %v190, 4294901760
      %225 = vmatpush1.msra.mxu0 %v224
      %226 = vmatprep.subr.mxu0 0.0
      %v227 = vand.u32 %v189, 4294901760
      %228 = vmatpush1.msra.mxu0 %v227
      %229 = vmatprep.subr.mxu0 0.0
      %v230 = vand.u32 %v188, 4294901760
      %231 = vmatpush1.msra.mxu0 %v230
      %232 = vmatprep.subr.mxu0 0.0
      %v233 = vand.u32 %v187, 4294901760
      %234 = vmatpush1.msra.mxu0 %v233
      %235 = vmatprep.subr.mxu0 0.0
      %v236 = vand.u32 %v186, 4294901760
      %237 = vmatpush1.msra.mxu0 %v236
      %238 = vmatprep.subr.mxu0 0.0
      %v239 = vand.u32 %v185, 4294901760
      %240 = vmatpush1.msra.mxu0 %v239
      %241 = vmatprep.subr.mxu0 0.0
      %v242 = vand.u32 %v184, 4294901760
      %243 = vmatpush1.msra.mxu0 %v242
      %244 = vmatprep.subr.mxu0 0.0
      %v245 = vand.u32 %v183, 4294901760
      %246 = vmatpush1.msra.mxu0 %v245
      %247 = vmatprep.subr.mxu0 0.0
      %248 = vmatpush2.msra.mxu0 0.0
      %249 = vmatprep.subr.mxu0 0.0
      %250 = vmatpush2.msra.mxu0 0.0
      %251 = vmatprep.subr.mxu0 0.0
      %252 = vmatpush2.msra.mxu0 0.0
      %253 = vmatprep.subr.mxu0 0.0
      %254 = vmatpush2.msra.mxu0 0.0
      %255 = vmatprep.subr.mxu0 0.0
      %256 = vmatpush2.msra.mxu0 0.0
      %257 = vmatprep.subr.mxu0 0.0
      %258 = vmatpush2.msra.mxu0 0.0
      %259 = vmatprep.subr.mxu0 0.0
      %260 = vmatpush2.msra.mxu0 0.0
      %261 = vmatprep.subr.mxu0 0.0
      %262 = vmatpush2.msra.mxu0 0.0
      %263 = vmatprep.subr.mxu0 0.0
      %264 = vmatpush2.msra.mxu0 0.0
      %265 = vmatprep.subr.mxu0 0.0
      %266 = vmatpush2.msra.mxu0 0.0
      %267 = vmatprep.subr.mxu0 0.0
      %268 = vmatpush2.msra.mxu0 0.0
      %269 = vmatprep.subr.mxu0 0.0
      %270 = vmatpush2.msra.mxu0 0.0
      %271 = vmatprep.subr.mxu0 0.0
      %272 = vmatpush2.msra.mxu0 0.0
      %273 = vmatprep.subr.mxu0 0.0
      %274 = vmatpush2.msra.mxu0 0.0
      %275 = vmatprep.subr.mxu0 0.0
      %276 = vmatpush2.msra.mxu0 0.0
      %277 = vmatprep.subr.mxu0 0.0
      %278 = vmatpush2.msra.mxu0 0.0
      %279 = vmatprep.mubr.f32.mxu0 0.0
      %v280 = vand.u32 %v174, 4294901760
      %v281 = vsub.f32 %v174, %v280
      %v282 = vand.u32 %v281, 4294901760
      %v283 = vsub.f32 %v281, %v282
      %v284 = vand.u32 %v283, 4294901760
      %285 = vmatmul.mubr.f32.gmra.mxu0 %v284
      %v286 = vpop.f32.mrf.mxu0
      %v287 = vadd.f32 0.0, %v286
      %v288 = vpop.f32.mrf.mxu0
      %289 = vmatprep.mubr.f32.mxu0 0.0
      %v290 = vand.u32 %v175, 4294901760
      %v291 = vsub.f32 %v175, %v290
      %v292 = vand.u32 %v291, 4294901760
      %v293 = vsub.f32 %v291, %v292
      %v294 = vand.u32 %v293, 4294901760
      %295 = vmatmul.mubr.f32.gmra.mxu0 %v294
      %v296 = vpop.f32.mrf.mxu0
      %v297 = vadd.f32 0.0, %v296
      %v298 = vpop.f32.mrf.mxu0
      %299 = vmatprep.mubr.f32.mxu0 0.0
      %v300 = vand.u32 %v176, 4294901760
      %v301 = vsub.f32 %v176, %v300
      %v302 = vand.u32 %v301, 4294901760
      %v303 = vsub.f32 %v301, %v302
      %v304 = vand.u32 %v303, 4294901760
      %305 = vmatmul.mubr.f32.gmra.mxu0 %v304
      %v306 = vpop.f32.mrf.mxu0
      %v307 = vadd.f32 0.0, %v306
      %v308 = vpop.f32.mrf.mxu0
      %309 = vmatprep.mubr.f32.mxu0 0.0
      %v310 = vand.u32 %v177, 4294901760
      %v311 = vsub.f32 %v177, %v310
      %v312 = vand.u32 %v311, 4294901760
      %v313 = vsub.f32 %v311, %v312
      %v314 = vand.u32 %v313, 4294901760
      %315 = vmatmul.mubr.f32.gmra.mxu0 %v314
      %v316 = vpop.f32.mrf.mxu0
      %v317 = vadd.f32 0.0, %v316
      %v318 = vpop.f32.mrf.mxu0
      %319 = vmatprep.mubr.f32.mxu0 0.0
      %v320 = vand.u32 %v178, 4294901760
      %v321 = vsub.f32 %v178, %v320
      %v322 = vand.u32 %v321, 4294901760
      %v323 = vsub.f32 %v321, %v322
      %v324 = vand.u32 %v323, 4294901760
      %325 = vmatmul.mubr.f32.gmra.mxu0 %v324
      %v326 = vpop.f32.mrf.mxu0
      %v327 = vadd.f32 0.0, %v326
      %v328 = vpop.f32.mrf.mxu0
      %329 = vmatprep.mubr.f32.mxu0 0.0
      %v330 = vand.u32 %v179, 4294901760
      %v331 = vsub.f32 %v179, %v330
      %v332 = vand.u32 %v331, 4294901760
      %v333 = vsub.f32 %v331, %v332
      %v334 = vand.u32 %v333, 4294901760
      %335 = vmatmul.mubr.f32.gmra.mxu0 %v334
      %v336 = vpop.f32.mrf.mxu0
      %v337 = vadd.f32 0.0, %v336
      %v338 = vpop.f32.mrf.mxu0
      %339 = vmatprep.mubr.f32.mxu0 0.0
      %v340 = vand.u32 %v180, 4294901760
      %v341 = vsub.f32 %v180, %v340
      %v342 = vand.u32 %v341, 4294901760
      %v343 = vsub.f32 %v341, %v342
      %v344 = vand.u32 %v343, 4294901760
      %345 = vmatmul.mubr.f32.gmra.mxu0 %v344
      %v346 = vpop.f32.mrf.mxu0
      %v347 = vadd.f32 0.0, %v346
      %v348 = vpop.f32.mrf.mxu0
      %349 = vmatprep.mubr.f32.mxu0 0.0
      %v350 = vand.u32 %v181, 4294901760
      %v351 = vsub.f32 %v181, %v350
      %v352 = vand.u32 %v351, 4294901760
      %v353 = vsub.f32 %v351, %v352
      %v354 = vand.u32 %v353, 4294901760
      %355 = vmatmul.mubr.f32.gmra.mxu0 %v354
      %v356 = vpop.f32.mrf.mxu0
      %v357 = vadd.f32 0.0, %v356
      %v358 = vpop.f32.mrf.mxu0
      %359 = vdwg.mxu0
      %360 = vmatprep.subr.mxu0 0.0
      %v361 = vand.u32 %v198, 4294901760
      %v362 = vsub.f32 %v198, %v361
      %v363 = vand.u32 %v362, 4294901760
      %v364 = vsub.f32 %v362, %v363
      %v365 = vand.u32 %v364, 4294901760
      %366 = vmatpush1.msra.mxu0 %v365
      %367 = vmatprep.subr.mxu0 0.0
      %v368 = vand.u32 %v197, 4294901760
      %v369 = vsub.f32 %v197, %v368
      %v370 = vand.u32 %v369, 4294901760
      %v371 = vsub.f32 %v369, %v370
      %v372 = vand.u32 %v371, 4294901760
      %373 = vmatpush1.msra.mxu0 %v372
      %374 = vmatprep.subr.mxu0 0.0
      %v375 = vand.u32 %v196, 4294901760
      %v376 = vsub.f32 %v196, %v375
      %v377 = vand.u32 %v376, 4294901760
      %v378 = vsub.f32 %v376, %v377
      %v379 = vand.u32 %v378, 4294901760
      %380 = vmatpush1.msra.mxu0 %v379
      %381 = vmatprep.subr.mxu0 0.0
      %v382 = vand.u32 %v195, 4294901760
      %v383 = vsub.f32 %v195, %v382
      %v384 = vand.u32 %v383, 4294901760
      %v385 = vsub.f32 %v383, %v384
      %v386 = vand.u32 %v385, 4294901760
      %387 = vmatpush1.msra.mxu0 %v386
      %388 = vmatprep.subr.mxu0 0.0
      %v389 = vand.u32 %v194, 4294901760
      %v390 = vsub.f32 %v194, %v389
      %v391 = vand.u32 %v390, 4294901760
      %v392 = vsub.f32 %v390, %v391
      %v393 = vand.u32 %v392, 4294901760
      %394 = vmatpush1.msra.mxu0 %v393
      %395 = vmatprep.subr.mxu0 0.0
      %v396 = vand.u32 %v193, 4294901760
      %v397 = vsub.f32 %v193, %v396
      %v398 = vand.u32 %v397, 4294901760
      %v399 = vsub.f32 %v397, %v398
      %v400 = vand.u32 %v399, 4294901760
      %401 = vmatpush1.msra.mxu0 %v400
      %402 = vmatprep.subr.mxu0 0.0
      %v403 = vand.u32 %v192, 4294901760
      %v404 = vsub.f32 %v192, %v403
      %v405 = vand.u32 %v404, 4294901760
      %v406 = vsub.f32 %v404, %v405
      %v407 = vand.u32 %v406, 4294901760
      %408 = vmatpush1.msra.mxu0 %v407
      %409 = vmatprep.subr.mxu0 0.0
      %v410 = vand.u32 %v191, 4294901760
      %v411 = vsub.f32 %v191, %v410
      %v412 = vand.u32 %v411, 4294901760
      %v413 = vsub.f32 %v411, %v412
      %v414 = vand.u32 %v413, 4294901760
      %415 = vmatpush1.msra.mxu0 %v414
      %416 = vmatprep.subr.mxu0 0.0
      %v417 = vand.u32 %v190, 4294901760
      %v418 = vsub.f32 %v190, %v417
      %v419 = vand.u32 %v418, 4294901760
      %v420 = vsub.f32 %v418, %v419
      %v421 = vand.u32 %v420, 4294901760
      %422 = vmatpush1.msra.mxu0 %v421
      %423 = vmatprep.subr.mxu0 0.0
      %v424 = vand.u32 %v189, 4294901760
      %v425 = vsub.f32 %v189, %v424
      %v426 = vand.u32 %v425, 4294901760
      %v427 = vsub.f32 %v425, %v426
      %v428 = vand.u32 %v427, 4294901760
      %429 = vmatpush1.msra.mxu0 %v428
      %430 = vmatprep.subr.mxu0 0.0
      %v431 = vand.u32 %v188, 4294901760
      %v432 = vsub.f32 %v188, %v431
      %v433 = vand.u32 %v432, 4294901760
      %v434 = vsub.f32 %v432, %v433
      %v435 = vand.u32 %v434, 4294901760
      %436 = vmatpush1.msra.mxu0 %v435
      %437 = vmatprep.subr.mxu0 0.0
      %v438 = vand.u32 %v187, 4294901760
      %v439 = vsub.f32 %v187, %v438
      %v440 = vand.u32 %v439, 4294901760
      %v441 = vsub.f32 %v439, %v440
      %v442 = vand.u32 %v441, 4294901760
      %443 = vmatpush1.msra.mxu0 %v442
      %444 = vmatprep.subr.mxu0 0.0
      %v445 = vand.u32 %v186, 4294901760
      %v446 = vsub.f32 %v186, %v445
      %v447 = vand.u32 %v446, 4294901760
      %v448 = vsub.f32 %v446, %v447
      %v449 = vand.u32 %v448, 4294901760
      %450 = vmatpush1.msra.mxu0 %v449
      %451 = vmatprep.subr.mxu0 0.0
      %v452 = vand.u32 %v185, 4294901760
      %v453 = vsub.f32 %v185, %v452
      %v454 = vand.u32 %v453, 4294901760
      %v455 = vsub.f32 %v453, %v454
      %v456 = vand.u32 %v455, 4294901760
      %457 = vmatpush1.msra.mxu0 %v456
      %458 = vmatprep.subr.mxu0 0.0
      %v459 = vand.u32 %v184, 4294901760
      %v460 = vsub.f32 %v184, %v459
      %v461 = vand.u32 %v460, 4294901760
      %v462 = vsub.f32 %v460, %v461
      %v463 = vand.u32 %v462, 4294901760
      %464 = vmatpush1.msra.mxu0 %v463
      %465 = vmatprep.subr.mxu0 0.0
      %v466 = vand.u32 %v183, 4294901760
      %v467 = vsub.f32 %v183, %v466
      %v468 = vand.u32 %v467, 4294901760
      %v469 = vsub.f32 %v467, %v468
      %v470 = vand.u32 %v469, 4294901760
      %471 = vmatpush1.msra.mxu0 %v470
      %472 = vmatprep.subr.mxu0 0.0
      %473 = vmatpush2.msra.mxu0 0.0
      %474 = vmatprep.subr.mxu0 0.0
      %475 = vmatpush2.msra.mxu0 0.0
      %476 = vmatprep.subr.mxu0 0.0
      %477 = vmatpush2.msra.mxu0 0.0
      %478 = vmatprep.subr.mxu0 0.0
      %479 = vmatpush2.msra.mxu0 0.0
      %480 = vmatprep.subr.mxu0 0.0
      %481 = vmatpush2.msra.mxu0 0.0
      %482 = vmatprep.subr.mxu0 0.0
      %483 = vmatpush2.msra.mxu0 0.0
      %484 = vmatprep.subr.mxu0 0.0
      %485 = vmatpush2.msra.mxu0 0.0
      %486 = vmatprep.subr.mxu0 0.0
      %487 = vmatpush2.msra.mxu0 0.0
      %488 = vmatprep.subr.mxu0 0.0
      %489 = vmatpush2.msra.mxu0 0.0
      %490 = vmatprep.subr.mxu0 0.0
      %491 = vmatpush2.msra.mxu0 0.0
      %492 = vmatprep.subr.mxu0 0.0
      %493 = vmatpush2.msra.mxu0 0.0
      %494 = vmatprep.subr.mxu0 0.0
      %495 = vmatpush2.msra.mxu0 0.0
      %496 = vmatprep.subr.mxu0 0.0
      %497 = vmatpush2.msra.mxu0 0.0
      %498 = vmatprep.subr.mxu0 0.0
      %499 = vmatpush2.msra.mxu0 0.0
      %500 = vmatprep.subr.mxu0 0.0
      %501 = vmatpush2.msra.mxu0 0.0
      %502 = vmatprep.subr.mxu0 0.0
      %503 = vmatpush2.msra.mxu0 0.0
      %504 = vmatprep.mubr.f32.mxu0 0.0
      %v505 = vand.u32 %v174, 4294901760
      %506 = vmatmul.mubr.f32.gmra.mxu0 %v505
      %v507 = vpop.f32.mrf.mxu0
      %v508 = vadd.f32 %v287, %v507
      %v509 = vpop.f32.mrf.mxu0
      %510 = vmatprep.mubr.f32.mxu0 0.0
      %v511 = vand.u32 %v175, 4294901760
      %512 = vmatmul.mubr.f32.gmra.mxu0 %v511
      %v513 = vpop.f32.mrf.mxu0
      %v514 = vadd.f32 %v297, %v513
      %v515 = vpop.f32.mrf.mxu0
      %516 = vmatprep.mubr.f32.mxu0 0.0
      %v517 = vand.u32 %v176, 4294901760
      %518 = vmatmul.mubr.f32.gmra.mxu0 %v517
      %v519 = vpop.f32.mrf.mxu0
      %v520 = vadd.f32 %v307, %v519
      %v521 = vpop.f32.mrf.mxu0
      %522 = vmatprep.mubr.f32.mxu0 0.0
      %v523 = vand.u32 %v177, 4294901760
      %524 = vmatmul.mubr.f32.gmra.mxu0 %v523
      %v525 = vpop.f32.mrf.mxu0
      %v526 = vadd.f32 %v317, %v525
      %v527 = vpop.f32.mrf.mxu0
      %528 = vmatprep.mubr.f32.mxu0 0.0
      %v529 = vand.u32 %v178, 4294901760
      %530 = vmatmul.mubr.f32.gmra.mxu0 %v529
      %v531 = vpop.f32.mrf.mxu0
      %v532 = vadd.f32 %v327, %v531
      %v533 = vpop.f32.mrf.mxu0
      %534 = vmatprep.mubr.f32.mxu0 0.0
      %v535 = vand.u32 %v179, 4294901760
      %536 = vmatmul.mubr.f32.gmra.mxu0 %v535
      %v537 = vpop.f32.mrf.mxu0
      %v538 = vadd.f32 %v337, %v537
      %v539 = vpop.f32.mrf.mxu0
      %540 = vmatprep.mubr.f32.mxu0 0.0
      %v541 = vand.u32 %v180, 4294901760
      %542 = vmatmul.mubr.f32.gmra.mxu0 %v541
      %v543 = vpop.f32.mrf.mxu0
      %v544 = vadd.f32 %v347, %v543
      %v545 = vpop.f32.mrf.mxu0
      %546 = vmatprep.mubr.f32.mxu0 0.0
      %v547 = vand.u32 %v181, 4294901760
      %548 = vmatmul.mubr.f32.gmra.mxu0 %v547
      %v549 = vpop.f32.mrf.mxu0
      %v550 = vadd.f32 %v357, %v549
      %v551 = vpop.f32.mrf.mxu0
      %552 = vdwg.mxu0
      %553 = vmatprep.subr.mxu0 0.0
      %v554 = vand.u32 %v198, 4294901760
      %v555 = vsub.f32 %v198, %v554
      %556 = vmatpush1.msra.mxu0 %v555
      %557 = vmatprep.subr.mxu0 0.0
      %v558 = vand.u32 %v197, 4294901760
      %v559 = vsub.f32 %v197, %v558
      %560 = vmatpush1.msra.mxu0 %v559
      %561 = vmatprep.subr.mxu0 0.0
      %v562 = vand.u32 %v196, 4294901760
      %v563 = vsub.f32 %v196, %v562
      %564 = vmatpush1.msra.mxu0 %v563
      %565 = vmatprep.subr.mxu0 0.0
      %v566 = vand.u32 %v195, 4294901760
      %v567 = vsub.f32 %v195, %v566
      %568 = vmatpush1.msra.mxu0 %v567
      %569 = vmatprep.subr.mxu0 0.0
      %v570 = vand.u32 %v194, 4294901760
      %v571 = vsub.f32 %v194, %v570
      %572 = vmatpush1.msra.mxu0 %v571
      %573 = vmatprep.subr.mxu0 0.0
      %v574 = vand.u32 %v193, 4294901760
      %v575 = vsub.f32 %v193, %v574
      %576 = vmatpush1.msra.mxu0 %v575
      %577 = vmatprep.subr.mxu0 0.0
      %v578 = vand.u32 %v192, 4294901760
      %v579 = vsub.f32 %v192, %v578
      %580 = vmatpush1.msra.mxu0 %v579
      %581 = vmatprep.subr.mxu0 0.0
      %v582 = vand.u32 %v191, 4294901760
      %v583 = vsub.f32 %v191, %v582
      %584 = vmatpush1.msra.mxu0 %v583
      %585 = vmatprep.subr.mxu0 0.0
      %v586 = vand.u32 %v190, 4294901760
      %v587 = vsub.f32 %v190, %v586
      %588 = vmatpush1.msra.mxu0 %v587
      %589 = vmatprep.subr.mxu0 0.0
      %v590 = vand.u32 %v189, 4294901760
      %v591 = vsub.f32 %v189, %v590
      %592 = vmatpush1.msra.mxu0 %v591
      %593 = vmatprep.subr.mxu0 0.0
      %v594 = vand.u32 %v188, 4294901760
      %v595 = vsub.f32 %v188, %v594
      %596 = vmatpush1.msra.mxu0 %v595
      %597 = vmatprep.subr.mxu0 0.0
      %v598 = vand.u32 %v187, 4294901760
      %v599 = vsub.f32 %v187, %v598
      %600 = vmatpush1.msra.mxu0 %v599
      %601 = vmatprep.subr.mxu0 0.0
      %v602 = vand.u32 %v186, 4294901760
      %v603 = vsub.f32 %v186, %v602
      %604 = vmatpush1.msra.mxu0 %v603
      %605 = vmatprep.subr.mxu0 0.0
      %v606 = vand.u32 %v185, 4294901760
      %v607 = vsub.f32 %v185, %v606
      %608 = vmatpush1.msra.mxu0 %v607
      %609 = vmatprep.subr.mxu0 0.0
      %v610 = vand.u32 %v184, 4294901760
      %v611 = vsub.f32 %v184, %v610
      %612 = vmatpush1.msra.mxu0 %v611
      %613 = vmatprep.subr.mxu0 0.0
      %v614 = vand.u32 %v183, 4294901760
      %v615 = vsub.f32 %v183, %v614
      %616 = vmatpush1.msra.mxu0 %v615
      %617 = vmatprep.subr.mxu0 0.0
      %618 = vmatpush2.msra.mxu0 0.0
      %619 = vmatprep.subr.mxu0 0.0
      %620 = vmatpush2.msra.mxu0 0.0
      %621 = vmatprep.subr.mxu0 0.0
      %622 = vmatpush2.msra.mxu0 0.0
      %623 = vmatprep.subr.mxu0 0.0
      %624 = vmatpush2.msra.mxu0 0.0
      %625 = vmatprep.subr.mxu0 0.0
      %626 = vmatpush2.msra.mxu0 0.0
      %627 = vmatprep.subr.mxu0 0.0
      %628 = vmatpush2.msra.mxu0 0.0
      %629 = vmatprep.subr.mxu0 0.0
      %630 = vmatpush2.msra.mxu0 0.0
      %631 = vmatprep.subr.mxu0 0.0
      %632 = vmatpush2.msra.mxu0 0.0
      %633 = vmatprep.subr.mxu0 0.0
      %634 = vmatpush2.msra.mxu0 0.0
      %635 = vmatprep.subr.mxu0 0.0
      %636 = vmatpush2.msra.mxu0 0.0
      %637 = vmatprep.subr.mxu0 0.0
      %638 = vmatpush2.msra.mxu0 0.0
      %639 = vmatprep.subr.mxu0 0.0
      %640 = vmatpush2.msra.mxu0 0.0
      %641 = vmatprep.subr.mxu0 0.0
      %642 = vmatpush2.msra.mxu0 0.0
      %643 = vmatprep.subr.mxu0 0.0
      %644 = vmatpush2.msra.mxu0 0.0
      %645 = vmatprep.subr.mxu0 0.0
      %646 = vmatpush2.msra.mxu0 0.0
      %647 = vmatprep.subr.mxu0 0.0
      %648 = vmatpush2.msra.mxu0 0.0
      %649 = vmatprep.mubr.f32.mxu0 0.0
      %v650 = vand.u32 %v174, 4294901760
      %v651 = vsub.f32 %v174, %v650
      %652 = vmatmul.mubr.f32.gmra.mxu0 %v651
      %v653 = vpop.f32.mrf.mxu0
      %v654 = vadd.f32 %v508, %v653
      %v655 = vpop.f32.mrf.mxu0
      %656 = vmatprep.mubr.f32.mxu0 0.0
      %v657 = vand.u32 %v175, 4294901760
      %v658 = vsub.f32 %v175, %v657
      %659 = vmatmul.mubr.f32.gmra.mxu0 %v658
      %v660 = vpop.f32.mrf.mxu0
      %v661 = vadd.f32 %v514, %v660
      %v662 = vpop.f32.mrf.mxu0
      %663 = vmatprep.mubr.f32.mxu0 0.0
      %v664 = vand.u32 %v176, 4294901760
      %v665 = vsub.f32 %v176, %v664
      %666 = vmatmul.mubr.f32.gmra.mxu0 %v665
      %v667 = vpop.f32.mrf.mxu0
      %v668 = vadd.f32 %v520, %v667
      %v669 = vpop.f32.mrf.mxu0
      %670 = vmatprep.mubr.f32.mxu0 0.0
      %v671 = vand.u32 %v177, 4294901760
      %v672 = vsub.f32 %v177, %v671
      %673 = vmatmul.mubr.f32.gmra.mxu0 %v672
      %v674 = vpop.f32.mrf.mxu0
      %v675 = vadd.f32 %v526, %v674
      %v676 = vpop.f32.mrf.mxu0
      %677 = vmatprep.mubr.f32.mxu0 0.0
      %v678 = vand.u32 %v178, 4294901760
      %v679 = vsub.f32 %v178, %v678
      %680 = vmatmul.mubr.f32.gmra.mxu0 %v679
      %v681 = vpop.f32.mrf.mxu0
      %v682 = vadd.f32 %v532, %v681
      %v683 = vpop.f32.mrf.mxu0
      %684 = vmatprep.mubr.f32.mxu0 0.0
      %v685 = vand.u32 %v179, 4294901760
      %v686 = vsub.f32 %v179, %v685
      %687 = vmatmul.mubr.f32.gmra.mxu0 %v686
      %v688 = vpop.f32.mrf.mxu0
      %v689 = vadd.f32 %v538, %v688
      %v690 = vpop.f32.mrf.mxu0
      %691 = vmatprep.mubr.f32.mxu0 0.0
      %v692 = vand.u32 %v180, 4294901760
      %v693 = vsub.f32 %v180, %v692
      %694 = vmatmul.mubr.f32.gmra.mxu0 %v693
      %v695 = vpop.f32.mrf.mxu0
      %v696 = vadd.f32 %v544, %v695
      %v697 = vpop.f32.mrf.mxu0
      %698 = vmatprep.mubr.f32.mxu0 0.0
      %v699 = vand.u32 %v181, 4294901760
      %v700 = vsub.f32 %v181, %v699
      %701 = vmatmul.mubr.f32.gmra.mxu0 %v700
      %v702 = vpop.f32.mrf.mxu0
      %v703 = vadd.f32 %v550, %v702
      %v704 = vpop.f32.mrf.mxu0
      %705 = vdwg.mxu0
      %706 = vmatprep.subr.mxu0 0.0
      %v707 = vand.u32 %v198, 4294901760
      %708 = vmatpush1.msra.mxu0 %v707
      %709 = vmatprep.subr.mxu0 0.0
      %v710 = vand.u32 %v197, 4294901760
      %711 = vmatpush1.msra.mxu0 %v710
      %712 = vmatprep.subr.mxu0 0.0
      %v713 = vand.u32 %v196, 4294901760
      %714 = vmatpush1.msra.mxu0 %v713
      %715 = vmatprep.subr.mxu0 0.0
      %v716 = vand.u32 %v195, 4294901760
      %717 = vmatpush1.msra.mxu0 %v716
      %718 = vmatprep.subr.mxu0 0.0
      %v719 = vand.u32 %v194, 4294901760
      %720 = vmatpush1.msra.mxu0 %v719
      %721 = vmatprep.subr.mxu0 0.0
      %v722 = vand.u32 %v193, 4294901760
      %723 = vmatpush1.msra.mxu0 %v722
      %724 = vmatprep.subr.mxu0 0.0
      %v725 = vand.u32 %v192, 4294901760
      %726 = vmatpush1.msra.mxu0 %v725
      %727 = vmatprep.subr.mxu0 0.0
      %v728 = vand.u32 %v191, 4294901760
      %729 = vmatpush1.msra.mxu0 %v728
      %730 = vmatprep.subr.mxu0 0.0
      %v731 = vand.u32 %v190, 4294901760
      %732 = vmatpush1.msra.mxu0 %v731
      %733 = vmatprep.subr.mxu0 0.0
      %v734 = vand.u32 %v189, 4294901760
      %735 = vmatpush1.msra.mxu0 %v734
      %736 = vmatprep.subr.mxu0 0.0
      %v737 = vand.u32 %v188, 4294901760
      %738 = vmatpush1.msra.mxu0 %v737
      %739 = vmatprep.subr.mxu0 0.0
      %v740 = vand.u32 %v187, 4294901760
      %741 = vmatpush1.msra.mxu0 %v740
      %742 = vmatprep.subr.mxu0 0.0
      %v743 = vand.u32 %v186, 4294901760
      %744 = vmatpush1.msra.mxu0 %v743
      %745 = vmatprep.subr.mxu0 0.0
      %v746 = vand.u32 %v185, 4294901760
      %747 = vmatpush1.msra.mxu0 %v746
      %748 = vmatprep.subr.mxu0 0.0
      %v749 = vand.u32 %v184, 4294901760
      %750 = vmatpush1.msra.mxu0 %v749
      %751 = vmatprep.subr.mxu0 0.0
      %v752 = vand.u32 %v183, 4294901760
      %753 = vmatpush1.msra.mxu0 %v752
      %754 = vmatprep.subr.mxu0 0.0
      %755 = vmatpush2.msra.mxu0 0.0
      %756 = vmatprep.subr.mxu0 0.0
      %757 = vmatpush2.msra.mxu0 0.0
      %758 = vmatprep.subr.mxu0 0.0
      %759 = vmatpush2.msra.mxu0 0.0
      %760 = vmatprep.subr.mxu0 0.0
      %761 = vmatpush2.msra.mxu0 0.0
      %762 = vmatprep.subr.mxu0 0.0
      %763 = vmatpush2.msra.mxu0 0.0
      %764 = vmatprep.subr.mxu0 0.0
      %765 = vmatpush2.msra.mxu0 0.0
      %766 = vmatprep.subr.mxu0 0.0
      %767 = vmatpush2.msra.mxu0 0.0
      %768 = vmatprep.subr.mxu0 0.0
      %769 = vmatpush2.msra.mxu0 0.0
      %770 = vmatprep.subr.mxu0 0.0
      %771 = vmatpush2.msra.mxu0 0.0
      %772 = vmatprep.subr.mxu0 0.0
      %773 = vmatpush2.msra.mxu0 0.0
      %774 = vmatprep.subr.mxu0 0.0
      %775 = vmatpush2.msra.mxu0 0.0
      %776 = vmatprep.subr.mxu0 0.0
      %777 = vmatpush2.msra.mxu0 0.0
      %778 = vmatprep.subr.mxu0 0.0
      %779 = vmatpush2.msra.mxu0 0.0
      %780 = vmatprep.subr.mxu0 0.0
      %781 = vmatpush2.msra.mxu0 0.0
      %782 = vmatprep.subr.mxu0 0.0
      %783 = vmatpush2.msra.mxu0 0.0
      %784 = vmatprep.subr.mxu0 0.0
      %785 = vmatpush2.msra.mxu0 0.0
      %786 = vmatprep.mubr.f32.mxu0 0.0
      %v787 = vand.u32 %v174, 4294901760
      %v788 = vsub.f32 %v174, %v787
      %v789 = vand.u32 %v788, 4294901760
      %790 = vmatmul.mubr.f32.gmra.mxu0 %v789
      %v791 = vpop.f32.mrf.mxu0
      %v792 = vadd.f32 %v654, %v791
      %v793 = vpop.f32.mrf.mxu0
      %794 = vmatprep.mubr.f32.mxu0 0.0
      %v795 = vand.u32 %v175, 4294901760
      %v796 = vsub.f32 %v175, %v795
      %v797 = vand.u32 %v796, 4294901760
      %798 = vmatmul.mubr.f32.gmra.mxu0 %v797
      %v799 = vpop.f32.mrf.mxu0
      %v800 = vadd.f32 %v661, %v799
      %v801 = vpop.f32.mrf.mxu0
      %802 = vmatprep.mubr.f32.mxu0 0.0
      %v803 = vand.u32 %v176, 4294901760
      %v804 = vsub.f32 %v176, %v803
      %v805 = vand.u32 %v804, 4294901760
      %806 = vmatmul.mubr.f32.gmra.mxu0 %v805
      %v807 = vpop.f32.mrf.mxu0
      %v808 = vadd.f32 %v668, %v807
      %v809 = vpop.f32.mrf.mxu0
      %810 = vmatprep.mubr.f32.mxu0 0.0
      %v811 = vand.u32 %v177, 4294901760
      %v812 = vsub.f32 %v177, %v811
      %v813 = vand.u32 %v812, 4294901760
      %814 = vmatmul.mubr.f32.gmra.mxu0 %v813
      %v815 = vpop.f32.mrf.mxu0
      %v816 = vadd.f32 %v675, %v815
      %v817 = vpop.f32.mrf.mxu0
      %818 = vmatprep.mubr.f32.mxu0 0.0
      %v819 = vand.u32 %v178, 4294901760
      %v820 = vsub.f32 %v178, %v819
      %v821 = vand.u32 %v820, 4294901760
      %822 = vmatmul.mubr.f32.gmra.mxu0 %v821
      %v823 = vpop.f32.mrf.mxu0
      %v824 = vadd.f32 %v682, %v823
      %v825 = vpop.f32.mrf.mxu0
      %826 = vmatprep.mubr.f32.mxu0 0.0
      %v827 = vand.u32 %v179, 4294901760
      %v828 = vsub.f32 %v179, %v827
      %v829 = vand.u32 %v828, 4294901760
      %830 = vmatmul.mubr.f32.gmra.mxu0 %v829
      %v831 = vpop.f32.mrf.mxu0
      %v832 = vadd.f32 %v689, %v831
      %v833 = vpop.f32.mrf.mxu0
      %834 = vmatprep.mubr.f32.mxu0 0.0
      %v835 = vand.u32 %v180, 4294901760
      %v836 = vsub.f32 %v180, %v835
      %v837 = vand.u32 %v836, 4294901760
      %838 = vmatmul.mubr.f32.gmra.mxu0 %v837
      %v839 = vpop.f32.mrf.mxu0
      %v840 = vadd.f32 %v696, %v839
      %v841 = vpop.f32.mrf.mxu0
      %842 = vmatprep.mubr.f32.mxu0 0.0
      %v843 = vand.u32 %v181, 4294901760
      %v844 = vsub.f32 %v181, %v843
      %v845 = vand.u32 %v844, 4294901760
      %846 = vmatmul.mubr.f32.gmra.mxu0 %v845
      %v847 = vpop.f32.mrf.mxu0
      %v848 = vadd.f32 %v703, %v847
      %v849 = vpop.f32.mrf.mxu0
      %850 = vdwg.mxu0
      %851 = vmatprep.subr.mxu0 0.0
      %v852 = vand.u32 %v198, 4294901760
      %v853 = vsub.f32 %v198, %v852
      %v854 = vand.u32 %v853, 4294901760
      %855 = vmatpush1.msra.mxu0 %v854
      %856 = vmatprep.subr.mxu0 0.0
      %v857 = vand.u32 %v197, 4294901760
      %v858 = vsub.f32 %v197, %v857
      %v859 = vand.u32 %v858, 4294901760
      %860 = vmatpush1.msra.mxu0 %v859
      %861 = vmatprep.subr.mxu0 0.0
      %v862 = vand.u32 %v196, 4294901760
      %v863 = vsub.f32 %v196, %v862
      %v864 = vand.u32 %v863, 4294901760
      %865 = vmatpush1.msra.mxu0 %v864
      %866 = vmatprep.subr.mxu0 0.0
      %v867 = vand.u32 %v195, 4294901760
      %v868 = vsub.f32 %v195, %v867
      %v869 = vand.u32 %v868, 4294901760
      %870 = vmatpush1.msra.mxu0 %v869
      %871 = vmatprep.subr.mxu0 0.0
      %v872 = vand.u32 %v194, 4294901760
      %v873 = vsub.f32 %v194, %v872
      %v874 = vand.u32 %v873, 4294901760
      %875 = vmatpush1.msra.mxu0 %v874
      %876 = vmatprep.subr.mxu0 0.0
      %v877 = vand.u32 %v193, 4294901760
      %v878 = vsub.f32 %v193, %v877
      %v879 = vand.u32 %v878, 4294901760
      %880 = vmatpush1.msra.mxu0 %v879
      %881 = vmatprep.subr.mxu0 0.0
      %v882 = vand.u32 %v192, 4294901760
      %v883 = vsub.f32 %v192, %v882
      %v884 = vand.u32 %v883, 4294901760
      %885 = vmatpush1.msra.mxu0 %v884
      %886 = vmatprep.subr.mxu0 0.0
      %v887 = vand.u32 %v191, 4294901760
      %v888 = vsub.f32 %v191, %v887
      %v889 = vand.u32 %v888, 4294901760
      %890 = vmatpush1.msra.mxu0 %v889
      %891 = vmatprep.subr.mxu0 0.0
      %v892 = vand.u32 %v190, 4294901760
      %v893 = vsub.f32 %v190, %v892
      %v894 = vand.u32 %v893, 4294901760
      %895 = vmatpush1.msra.mxu0 %v894
      %896 = vmatprep.subr.mxu0 0.0
      %v897 = vand.u32 %v189, 4294901760
      %v898 = vsub.f32 %v189, %v897
      %v899 = vand.u32 %v898, 4294901760
      %900 = vmatpush1.msra.mxu0 %v899
      %901 = vmatprep.subr.mxu0 0.0
      %v902 = vand.u32 %v188, 4294901760
      %v903 = vsub.f32 %v188, %v902
      %v904 = vand.u32 %v903, 4294901760
      %905 = vmatpush1.msra.mxu0 %v904
      %906 = vmatprep.subr.mxu0 0.0
      %v907 = vand.u32 %v187, 4294901760
      %v908 = vsub.f32 %v187, %v907
      %v909 = vand.u32 %v908, 4294901760
      %910 = vmatpush1.msra.mxu0 %v909
      %911 = vmatprep.subr.mxu0 0.0
      %v912 = vand.u32 %v186, 4294901760
      %v913 = vsub.f32 %v186, %v912
      %v914 = vand.u32 %v913, 4294901760
      %915 = vmatpush1.msra.mxu0 %v914
      %916 = vmatprep.subr.mxu0 0.0
      %v917 = vand.u32 %v185, 4294901760
      %v918 = vsub.f32 %v185, %v917
      %v919 = vand.u32 %v918, 4294901760
      %920 = vmatpush1.msra.mxu0 %v919
      %921 = vmatprep.subr.mxu0 0.0
      %v922 = vand.u32 %v184, 4294901760
      %v923 = vsub.f32 %v184, %v922
      %v924 = vand.u32 %v923, 4294901760
      %925 = vmatpush1.msra.mxu0 %v924
      %926 = vmatprep.subr.mxu0 0.0
      %v927 = vand.u32 %v183, 4294901760
      %v928 = vsub.f32 %v183, %v927
      %v929 = vand.u32 %v928, 4294901760
      %930 = vmatpush1.msra.mxu0 %v929
      %931 = vmatprep.subr.mxu0 0.0
      %932 = vmatpush2.msra.mxu0 0.0
      %933 = vmatprep.subr.mxu0 0.0
      %934 = vmatpush2.msra.mxu0 0.0
      %935 = vmatprep.subr.mxu0 0.0
      %936 = vmatpush2.msra.mxu0 0.0
      %937 = vmatprep.subr.mxu0 0.0
      %938 = vmatpush2.msra.mxu0 0.0
      %939 = vmatprep.subr.mxu0 0.0
      %940 = vmatpush2.msra.mxu0 0.0
      %941 = vmatprep.subr.mxu0 0.0
      %942 = vmatpush2.msra.mxu0 0.0
      %943 = vmatprep.subr.mxu0 0.0
      %944 = vmatpush2.msra.mxu0 0.0
      %945 = vmatprep.subr.mxu0 0.0
      %946 = vmatpush2.msra.mxu0 0.0
      %947 = vmatprep.subr.mxu0 0.0
      %948 = vmatpush2.msra.mxu0 0.0
      %949 = vmatprep.subr.mxu0 0.0
      %950 = vmatpush2.msra.mxu0 0.0
      %951 = vmatprep.subr.mxu0 0.0
      %952 = vmatpush2.msra.mxu0 0.0
      %953 = vmatprep.subr.mxu0 0.0
      %954 = vmatpush2.msra.mxu0 0.0
      %955 = vmatprep.subr.mxu0 0.0
      %956 = vmatpush2.msra.mxu0 0.0
      %957 = vmatprep.subr.mxu0 0.0
      %958 = vmatpush2.msra.mxu0 0.0
      %959 = vmatprep.subr.mxu0 0.0
      %960 = vmatpush2.msra.mxu0 0.0
      %961 = vmatprep.subr.mxu0 0.0
      %962 = vmatpush2.msra.mxu0 0.0
      %963 = vmatprep.mubr.f32.mxu0 0.0
      %v964 = vand.u32 %v174, 4294901760
      %965 = vmatmul.mubr.f32.gmra.mxu0 %v964
      %v966 = vpop.f32.mrf.mxu0
      %v967 = vadd.f32 %v792, %v966
      %v968 = vpop.f32.mrf.mxu0
      %969 = vmatprep.mubr.f32.mxu0 0.0
      %v970 = vand.u32 %v175, 4294901760
      %971 = vmatmul.mubr.f32.gmra.mxu0 %v970
      %v972 = vpop.f32.mrf.mxu0
      %v973 = vadd.f32 %v800, %v972
      %v974 = vpop.f32.mrf.mxu0
      %975 = vmatprep.mubr.f32.mxu0 0.0
      %v976 = vand.u32 %v176, 4294901760
      %977 = vmatmul.mubr.f32.gmra.mxu0 %v976
      %v978 = vpop.f32.mrf.mxu0
      %v979 = vadd.f32 %v808, %v978
      %v980 = vpop.f32.mrf.mxu0
      %981 = vmatprep.mubr.f32.mxu0 0.0
      %v982 = vand.u32 %v177, 4294901760
      %983 = vmatmul.mubr.f32.gmra.mxu0 %v982
      %v984 = vpop.f32.mrf.mxu0
      %v985 = vadd.f32 %v816, %v984
      %v986 = vpop.f32.mrf.mxu0
      %987 = vmatprep.mubr.f32.mxu0 0.0
      %v988 = vand.u32 %v178, 4294901760
      %989 = vmatmul.mubr.f32.gmra.mxu0 %v988
      %v990 = vpop.f32.mrf.mxu0
      %v991 = vadd.f32 %v824, %v990
      %v992 = vpop.f32.mrf.mxu0
      %993 = vmatprep.mubr.f32.mxu0 0.0
      %v994 = vand.u32 %v179, 4294901760
      %995 = vmatmul.mubr.f32.gmra.mxu0 %v994
      %v996 = vpop.f32.mrf.mxu0
      %v997 = vadd.f32 %v832, %v996
      %v998 = vpop.f32.mrf.mxu0
      %999 = vmatprep.mubr.f32.mxu0 0.0
      %v1000 = vand.u32 %v180, 4294901760
      %1001 = vmatmul.mubr.f32.gmra.mxu0 %v1000
      %v1002 = vpop.f32.mrf.mxu0
      %v1003 = vadd.f32 %v840, %v1002
      %v1004 = vpop.f32.mrf.mxu0
      %1005 = vmatprep.mubr.f32.mxu0 0.0
      %v1006 = vand.u32 %v181, 4294901760
      %1007 = vmatmul.mubr.f32.gmra.mxu0 %v1006
      %v1008 = vpop.f32.mrf.mxu0
      %v1009 = vadd.f32 %v848, %v1008
      %v1010 = vpop.f32.mrf.mxu0
      %1011 = vdwg.mxu0
      %1012 = vmatprep.subr.mxu0 0.0
      %v1013 = vand.u32 %v198, 4294901760
      %1014 = vmatpush1.msra.mxu0 %v1013
      %1015 = vmatprep.subr.mxu0 0.0
      %v1016 = vand.u32 %v197, 4294901760
      %1017 = vmatpush1.msra.mxu0 %v1016
      %1018 = vmatprep.subr.mxu0 0.0
      %v1019 = vand.u32 %v196, 4294901760
      %1020 = vmatpush1.msra.mxu0 %v1019
      %1021 = vmatprep.subr.mxu0 0.0
      %v1022 = vand.u32 %v195, 4294901760
      %1023 = vmatpush1.msra.mxu0 %v1022
      %1024 = vmatprep.subr.mxu0 0.0
      %v1025 = vand.u32 %v194, 4294901760
      %1026 = vmatpush1.msra.mxu0 %v1025
      %1027 = vmatprep.subr.mxu0 0.0
      %v1028 = vand.u32 %v193, 4294901760
      %1029 = vmatpush1.msra.mxu0 %v1028
      %1030 = vmatprep.subr.mxu0 0.0
      %v1031 = vand.u32 %v192, 4294901760
      %1032 = vmatpush1.msra.mxu0 %v1031
      %1033 = vmatprep.subr.mxu0 0.0
      %v1034 = vand.u32 %v191, 4294901760
      %1035 = vmatpush1.msra.mxu0 %v1034
      %1036 = vmatprep.subr.mxu0 0.0
      %v1037 = vand.u32 %v190, 4294901760
      %1038 = vmatpush1.msra.mxu0 %v1037
      %1039 = vmatprep.subr.mxu0 0.0
      %v1040 = vand.u32 %v189, 4294901760
      %1041 = vmatpush1.msra.mxu0 %v1040
      %1042 = vmatprep.subr.mxu0 0.0
      %v1043 = vand.u32 %v188, 4294901760
      %1044 = vmatpush1.msra.mxu0 %v1043
      %1045 = vmatprep.subr.mxu0 0.0
      %v1046 = vand.u32 %v187, 4294901760
      %1047 = vmatpush1.msra.mxu0 %v1046
      %1048 = vmatprep.subr.mxu0 0.0
      %v1049 = vand.u32 %v186, 4294901760
      %1050 = vmatpush1.msra.mxu0 %v1049
      %1051 = vmatprep.subr.mxu0 0.0
      %v1052 = vand.u32 %v185, 4294901760
      %1053 = vmatpush1.msra.mxu0 %v1052
      %1054 = vmatprep.subr.mxu0 0.0
      %v1055 = vand.u32 %v184, 4294901760
      %1056 = vmatpush1.msra.mxu0 %v1055
      %1057 = vmatprep.subr.mxu0 0.0
      %v1058 = vand.u32 %v183, 4294901760
      %1059 = vmatpush1.msra.mxu0 %v1058
      %1060 = vmatprep.subr.mxu0 0.0
      %1061 = vmatpush2.msra.mxu0 0.0
      %1062 = vmatprep.subr.mxu0 0.0
      %1063 = vmatpush2.msra.mxu0 0.0
      %1064 = vmatprep.subr.mxu0 0.0
      %1065 = vmatpush2.msra.mxu0 0.0
      %1066 = vmatprep.subr.mxu0 0.0
      %1067 = vmatpush2.msra.mxu0 0.0
      %1068 = vmatprep.subr.mxu0 0.0
      %1069 = vmatpush2.msra.mxu0 0.0
      %1070 = vmatprep.subr.mxu0 0.0
      %1071 = vmatpush2.msra.mxu0 0.0
      %1072 = vmatprep.subr.mxu0 0.0
      %1073 = vmatpush2.msra.mxu0 0.0
      %1074 = vmatprep.subr.mxu0 0.0
      %1075 = vmatpush2.msra.mxu0 0.0
      %1076 = vmatprep.subr.mxu0 0.0
      %1077 = vmatpush2.msra.mxu0 0.0
      %1078 = vmatprep.subr.mxu0 0.0
      %1079 = vmatpush2.msra.mxu0 0.0
      %1080 = vmatprep.subr.mxu0 0.0
      %1081 = vmatpush2.msra.mxu0 0.0
      %1082 = vmatprep.subr.mxu0 0.0
      %1083 = vmatpush2.msra.mxu0 0.0
      %1084 = vmatprep.subr.mxu0 0.0
      %1085 = vmatpush2.msra.mxu0 0.0
      %1086 = vmatprep.subr.mxu0 0.0
      %1087 = vmatpush2.msra.mxu0 0.0
      %1088 = vmatprep.subr.mxu0 0.0
      %1089 = vmatpush2.msra.mxu0 0.0
      %1090 = vmatprep.subr.mxu0 0.0
      %1091 = vmatpush2.msra.mxu0 0.0
      %1092 = vmatprep.mubr.f32.mxu0 0.0
      %v1093 = vand.u32 %v174, 4294901760
      %1094 = vmatmul.mubr.f32.gmra.mxu0 %v1093
      %v1095 = vpop.f32.mrf.mxu0
      %v1096 = vadd.f32 %v967, %v1095
      %v1097 = vpop.f32.mrf.mxu0
      %1098 = vmatprep.mubr.f32.mxu0 0.0
      %v1099 = vand.u32 %v175, 4294901760
      %1100 = vmatmul.mubr.f32.gmra.mxu0 %v1099
      %v1101 = vpop.f32.mrf.mxu0
      %v1102 = vadd.f32 %v973, %v1101
      %v1103 = vpop.f32.mrf.mxu0
      %1104 = vmatprep.mubr.f32.mxu0 0.0
      %v1105 = vand.u32 %v176, 4294901760
      %1106 = vmatmul.mubr.f32.gmra.mxu0 %v1105
      %v1107 = vpop.f32.mrf.mxu0
      %v1108 = vadd.f32 %v979, %v1107
      %v1109 = vpop.f32.mrf.mxu0
      %1110 = vmatprep.mubr.f32.mxu0 0.0
      %v1111 = vand.u32 %v177, 4294901760
      %1112 = vmatmul.mubr.f32.gmra.mxu0 %v1111
      %v1113 = vpop.f32.mrf.mxu0
      %v1114 = vadd.f32 %v985, %v1113
      %v1115 = vpop.f32.mrf.mxu0
      %1116 = vmatprep.mubr.f32.mxu0 0.0
      %v1117 = vand.u32 %v178, 4294901760
      %1118 = vmatmul.mubr.f32.gmra.mxu0 %v1117
      %v1119 = vpop.f32.mrf.mxu0
      %v1120 = vadd.f32 %v991, %v1119
      %v1121 = vpop.f32.mrf.mxu0
      %1122 = vmatprep.mubr.f32.mxu0 0.0
      %v1123 = vand.u32 %v179, 4294901760
      %1124 = vmatmul.mubr.f32.gmra.mxu0 %v1123
      %v1125 = vpop.f32.mrf.mxu0
      %v1126 = vadd.f32 %v997, %v1125
      %v1127 = vpop.f32.mrf.mxu0
      %1128 = vmatprep.mubr.f32.mxu0 0.0
      %v1129 = vand.u32 %v180, 4294901760
      %1130 = vmatmul.mubr.f32.gmra.mxu0 %v1129
      %v1131 = vpop.f32.mrf.mxu0
      %v1132 = vadd.f32 %v1003, %v1131
      %v1133 = vpop.f32.mrf.mxu0
      %1134 = vmatprep.mubr.f32.mxu0 0.0
      %v1135 = vand.u32 %v181, 4294901760
      %1136 = vmatmul.mubr.f32.gmra.mxu0 %v1135
      %v1137 = vpop.f32.mrf.mxu0
      %v1138 = vadd.f32 %v1009, %v1137
      %v1139 = vpop.f32.mrf.mxu0
      %1140 = vdwg.mxu0
      %v1141 = vmul.f32 %v174, %v174
      %v1142 = vmul.f32 %v175, %v175
      %v1143 = vmul.f32 %v176, %v176
      %v1144 = vmul.f32 %v177, %v177
      %v1145 = vmul.f32 %v178, %v178
      %v1146 = vmul.f32 %v179, %v179
      %v1147 = vmul.f32 %v180, %v180
      %v1148 = vmul.f32 %v181, %v181
      %1149 = vmatprep.subr.mxu0 0.0
      %v1150 = vand.u32 %v198, 4294901760
      %1151 = vmatpush1.msra.mxu0 %v1150
      %1152 = vmatprep.subr.mxu0 0.0
      %v1153 = vand.u32 %v197, 4294901760
      %1154 = vmatpush1.msra.mxu0 %v1153
      %1155 = vmatprep.subr.mxu0 0.0
      %v1156 = vand.u32 %v196, 4294901760
      %1157 = vmatpush1.msra.mxu0 %v1156
      %1158 = vmatprep.subr.mxu0 0.0
      %v1159 = vand.u32 %v195, 4294901760
      %1160 = vmatpush1.msra.mxu0 %v1159
      %1161 = vmatprep.subr.mxu0 0.0
      %v1162 = vand.u32 %v194, 4294901760
      %1163 = vmatpush1.msra.mxu0 %v1162
      %1164 = vmatprep.subr.mxu0 0.0
      %v1165 = vand.u32 %v193, 4294901760
      %1166 = vmatpush1.msra.mxu0 %v1165
      %1167 = vmatprep.subr.mxu0 0.0
      %v1168 = vand.u32 %v192, 4294901760
      %1169 = vmatpush1.msra.mxu0 %v1168
      %1170 = vmatprep.subr.mxu0 0.0
      %v1171 = vand.u32 %v191, 4294901760
      %1172 = vmatpush1.msra.mxu0 %v1171
      %1173 = vmatprep.subr.mxu0 0.0
      %v1174 = vand.u32 %v190, 4294901760
      %1175 = vmatpush1.msra.mxu0 %v1174
      %1176 = vmatprep.subr.mxu0 0.0
      %v1177 = vand.u32 %v189, 4294901760
      %1178 = vmatpush1.msra.mxu0 %v1177
      %1179 = vmatprep.subr.mxu0 0.0
      %v1180 = vand.u32 %v188, 4294901760
      %1181 = vmatpush1.msra.mxu0 %v1180
      %1182 = vmatprep.subr.mxu0 0.0
      %v1183 = vand.u32 %v187, 4294901760
      %1184 = vmatpush1.msra.mxu0 %v1183
      %1185 = vmatprep.subr.mxu0 0.0
      %v1186 = vand.u32 %v186, 4294901760
      %1187 = vmatpush1.msra.mxu0 %v1186
      %1188 = vmatprep.subr.mxu0 0.0
      %v1189 = vand.u32 %v185, 4294901760
      %1190 = vmatpush1.msra.mxu0 %v1189
      %1191 = vmatprep.subr.mxu0 0.0
      %v1192 = vand.u32 %v184, 4294901760
      %1193 = vmatpush1.msra.mxu0 %v1192
      %1194 = vmatprep.subr.mxu0 0.0
      %v1195 = vand.u32 %v183, 4294901760
      %1196 = vmatpush1.msra.mxu0 %v1195
      %1197 = vmatprep.subr.mxu0 0.0
      %1198 = vmatpush2.msra.mxu0 0.0
      %1199 = vmatprep.subr.mxu0 0.0
      %1200 = vmatpush2.msra.mxu0 0.0
      %1201 = vmatprep.subr.mxu0 0.0
      %1202 = vmatpush2.msra.mxu0 0.0
      %1203 = vmatprep.subr.mxu0 0.0
      %1204 = vmatpush2.msra.mxu0 0.0
      %1205 = vmatprep.subr.mxu0 0.0
      %1206 = vmatpush2.msra.mxu0 0.0
      %1207 = vmatprep.subr.mxu0 0.0
      %1208 = vmatpush2.msra.mxu0 0.0
      %1209 = vmatprep.subr.mxu0 0.0
      %1210 = vmatpush2.msra.mxu0 0.0
      %1211 = vmatprep.subr.mxu0 0.0
      %1212 = vmatpush2.msra.mxu0 0.0
      %1213 = vmatprep.subr.mxu0 0.0
      %1214 = vmatpush2.msra.mxu0 0.0
      %1215 = vmatprep.subr.mxu0 0.0
      %1216 = vmatpush2.msra.mxu0 0.0
      %1217 = vmatprep.subr.mxu0 0.0
      %1218 = vmatpush2.msra.mxu0 0.0
      %1219 = vmatprep.subr.mxu0 0.0
      %1220 = vmatpush2.msra.mxu0 0.0
      %1221 = vmatprep.subr.mxu0 0.0
      %1222 = vmatpush2.msra.mxu0 0.0
      %1223 = vmatprep.subr.mxu0 0.0
      %1224 = vmatpush2.msra.mxu0 0.0
      %1225 = vmatprep.subr.mxu0 0.0
      %1226 = vmatpush2.msra.mxu0 0.0
      %1227 = vmatprep.subr.mxu0 0.0
      %1228 = vmatpush2.msra.mxu0 0.0
      %1229 = vmatprep.mubr.f32.mxu0 0.0
      %v1230 = vand.u32 %v1141, 4294901760
      %v1231 = vsub.f32 %v1141, %v1230
      %v1232 = vand.u32 %v1231, 4294901760
      %v1233 = vsub.f32 %v1231, %v1232
      %v1234 = vand.u32 %v1233, 4294901760
      %1235 = vmatmul.mubr.f32.gmra.mxu0 %v1234
      %v1236 = vpop.f32.mrf.mxu0
      %v1237 = vadd.f32 0.0, %v1236
      %v1238 = vpop.f32.mrf.mxu0
      %1239 = vmatprep.mubr.f32.mxu0 0.0
      %v1240 = vand.u32 %v1142, 4294901760
      %v1241 = vsub.f32 %v1142, %v1240
      %v1242 = vand.u32 %v1241, 4294901760
      %v1243 = vsub.f32 %v1241, %v1242
      %v1244 = vand.u32 %v1243, 4294901760
      %1245 = vmatmul.mubr.f32.gmra.mxu0 %v1244
      %v1246 = vpop.f32.mrf.mxu0
      %v1247 = vadd.f32 0.0, %v1246
      %v1248 = vpop.f32.mrf.mxu0
      %1249 = vmatprep.mubr.f32.mxu0 0.0
      %v1250 = vand.u32 %v1143, 4294901760
      %v1251 = vsub.f32 %v1143, %v1250
      %v1252 = vand.u32 %v1251, 4294901760
      %v1253 = vsub.f32 %v1251, %v1252
      %v1254 = vand.u32 %v1253, 4294901760
      %1255 = vmatmul.mubr.f32.gmra.mxu0 %v1254
      %v1256 = vpop.f32.mrf.mxu0
      %v1257 = vadd.f32 0.0, %v1256
      %v1258 = vpop.f32.mrf.mxu0
      %1259 = vmatprep.mubr.f32.mxu0 0.0
      %v1260 = vand.u32 %v1144, 4294901760
      %v1261 = vsub.f32 %v1144, %v1260
      %v1262 = vand.u32 %v1261, 4294901760
      %v1263 = vsub.f32 %v1261, %v1262
      %v1264 = vand.u32 %v1263, 4294901760
      %1265 = vmatmul.mubr.f32.gmra.mxu0 %v1264
      %v1266 = vpop.f32.mrf.mxu0
      %v1267 = vadd.f32 0.0, %v1266
      %v1268 = vpop.f32.mrf.mxu0
      %1269 = vmatprep.mubr.f32.mxu0 0.0
      %v1270 = vand.u32 %v1145, 4294901760
      %v1271 = vsub.f32 %v1145, %v1270
      %v1272 = vand.u32 %v1271, 4294901760
      %v1273 = vsub.f32 %v1271, %v1272
      %v1274 = vand.u32 %v1273, 4294901760
      %1275 = vmatmul.mubr.f32.gmra.mxu0 %v1274
      %v1276 = vpop.f32.mrf.mxu0
      %v1277 = vadd.f32 0.0, %v1276
      %v1278 = vpop.f32.mrf.mxu0
      %1279 = vmatprep.mubr.f32.mxu0 0.0
      %v1280 = vand.u32 %v1146, 4294901760
      %v1281 = vsub.f32 %v1146, %v1280
      %v1282 = vand.u32 %v1281, 4294901760
      %v1283 = vsub.f32 %v1281, %v1282
      %v1284 = vand.u32 %v1283, 4294901760
      %1285 = vmatmul.mubr.f32.gmra.mxu0 %v1284
      %v1286 = vpop.f32.mrf.mxu0
      %v1287 = vadd.f32 0.0, %v1286
      %v1288 = vpop.f32.mrf.mxu0
      %1289 = vmatprep.mubr.f32.mxu0 0.0
      %v1290 = vand.u32 %v1147, 4294901760
      %v1291 = vsub.f32 %v1147, %v1290
      %v1292 = vand.u32 %v1291, 4294901760
      %v1293 = vsub.f32 %v1291, %v1292
      %v1294 = vand.u32 %v1293, 4294901760
      %1295 = vmatmul.mubr.f32.gmra.mxu0 %v1294
      %v1296 = vpop.f32.mrf.mxu0
      %v1297 = vadd.f32 0.0, %v1296
      %v1298 = vpop.f32.mrf.mxu0
      %1299 = vmatprep.mubr.f32.mxu0 0.0
      %v1300 = vand.u32 %v1148, 4294901760
      %v1301 = vsub.f32 %v1148, %v1300
      %v1302 = vand.u32 %v1301, 4294901760
      %v1303 = vsub.f32 %v1301, %v1302
      %v1304 = vand.u32 %v1303, 4294901760
      %1305 = vmatmul.mubr.f32.gmra.mxu0 %v1304
      %v1306 = vpop.f32.mrf.mxu0
      %v1307 = vadd.f32 0.0, %v1306
      %v1308 = vpop.f32.mrf.mxu0
      %1309 = vdwg.mxu0
      %1310 = vmatprep.subr.mxu0 0.0
      %v1311 = vand.u32 %v198, 4294901760
      %v1312 = vsub.f32 %v198, %v1311
      %v1313 = vand.u32 %v1312, 4294901760
      %v1314 = vsub.f32 %v1312, %v1313
      %v1315 = vand.u32 %v1314, 4294901760
      %1316 = vmatpush1.msra.mxu0 %v1315
      %1317 = vmatprep.subr.mxu0 0.0
      %v1318 = vand.u32 %v197, 4294901760
      %v1319 = vsub.f32 %v197, %v1318
      %v1320 = vand.u32 %v1319, 4294901760
      %v1321 = vsub.f32 %v1319, %v1320
      %v1322 = vand.u32 %v1321, 4294901760
      %1323 = vmatpush1.msra.mxu0 %v1322
      %1324 = vmatprep.subr.mxu0 0.0
      %v1325 = vand.u32 %v196, 4294901760
      %v1326 = vsub.f32 %v196, %v1325
      %v1327 = vand.u32 %v1326, 4294901760
      %v1328 = vsub.f32 %v1326, %v1327
      %v1329 = vand.u32 %v1328, 4294901760
      %1330 = vmatpush1.msra.mxu0 %v1329
      %1331 = vmatprep.subr.mxu0 0.0
      %v1332 = vand.u32 %v195, 4294901760
      %v1333 = vsub.f32 %v195, %v1332
      %v1334 = vand.u32 %v1333, 4294901760
      %v1335 = vsub.f32 %v1333, %v1334
      %v1336 = vand.u32 %v1335, 4294901760
      %1337 = vmatpush1.msra.mxu0 %v1336
      %1338 = vmatprep.subr.mxu0 0.0
      %v1339 = vand.u32 %v194, 4294901760
      %v1340 = vsub.f32 %v194, %v1339
      %v1341 = vand.u32 %v1340, 4294901760
      %v1342 = vsub.f32 %v1340, %v1341
      %v1343 = vand.u32 %v1342, 4294901760
      %1344 = vmatpush1.msra.mxu0 %v1343
      %1345 = vmatprep.subr.mxu0 0.0
      %v1346 = vand.u32 %v193, 4294901760
      %v1347 = vsub.f32 %v193, %v1346
      %v1348 = vand.u32 %v1347, 4294901760
      %v1349 = vsub.f32 %v1347, %v1348
      %v1350 = vand.u32 %v1349, 4294901760
      %1351 = vmatpush1.msra.mxu0 %v1350
      %1352 = vmatprep.subr.mxu0 0.0
      %v1353 = vand.u32 %v192, 4294901760
      %v1354 = vsub.f32 %v192, %v1353
      %v1355 = vand.u32 %v1354, 4294901760
      %v1356 = vsub.f32 %v1354, %v1355
      %v1357 = vand.u32 %v1356, 4294901760
      %1358 = vmatpush1.msra.mxu0 %v1357
      %1359 = vmatprep.subr.mxu0 0.0
      %v1360 = vand.u32 %v191, 4294901760
      %v1361 = vsub.f32 %v191, %v1360
      %v1362 = vand.u32 %v1361, 4294901760
      %v1363 = vsub.f32 %v1361, %v1362
      %v1364 = vand.u32 %v1363, 4294901760
      %1365 = vmatpush1.msra.mxu0 %v1364
      %1366 = vmatprep.subr.mxu0 0.0
      %v1367 = vand.u32 %v190, 4294901760
      %v1368 = vsub.f32 %v190, %v1367
      %v1369 = vand.u32 %v1368, 4294901760
      %v1370 = vsub.f32 %v1368, %v1369
      %v1371 = vand.u32 %v1370, 4294901760
      %1372 = vmatpush1.msra.mxu0 %v1371
      %1373 = vmatprep.subr.mxu0 0.0
      %v1374 = vand.u32 %v189, 4294901760
      %v1375 = vsub.f32 %v189, %v1374
      %v1376 = vand.u32 %v1375, 4294901760
      %v1377 = vsub.f32 %v1375, %v1376
      %v1378 = vand.u32 %v1377, 4294901760
      %1379 = vmatpush1.msra.mxu0 %v1378
      %1380 = vmatprep.subr.mxu0 0.0
      %v1381 = vand.u32 %v188, 4294901760
      %v1382 = vsub.f32 %v188, %v1381
      %v1383 = vand.u32 %v1382, 4294901760
      %v1384 = vsub.f32 %v1382, %v1383
      %v1385 = vand.u32 %v1384, 4294901760
      %1386 = vmatpush1.msra.mxu0 %v1385
      %1387 = vmatprep.subr.mxu0 0.0
      %v1388 = vand.u32 %v187, 4294901760
      %v1389 = vsub.f32 %v187, %v1388
      %v1390 = vand.u32 %v1389, 4294901760
      %v1391 = vsub.f32 %v1389, %v1390
      %v1392 = vand.u32 %v1391, 4294901760
      %1393 = vmatpush1.msra.mxu0 %v1392
      %1394 = vmatprep.subr.mxu0 0.0
      %v1395 = vand.u32 %v186, 4294901760
      %v1396 = vsub.f32 %v186, %v1395
      %v1397 = vand.u32 %v1396, 4294901760
      %v1398 = vsub.f32 %v1396, %v1397
      %v1399 = vand.u32 %v1398, 4294901760
      %1400 = vmatpush1.msra.mxu0 %v1399
      %1401 = vmatprep.subr.mxu0 0.0
      %v1402 = vand.u32 %v185, 4294901760
      %v1403 = vsub.f32 %v185, %v1402
      %v1404 = vand.u32 %v1403, 4294901760
      %v1405 = vsub.f32 %v1403, %v1404
      %v1406 = vand.u32 %v1405, 4294901760
      %1407 = vmatpush1.msra.mxu0 %v1406
      %1408 = vmatprep.subr.mxu0 0.0
      %v1409 = vand.u32 %v184, 4294901760
      %v1410 = vsub.f32 %v184, %v1409
      %v1411 = vand.u32 %v1410, 4294901760
      %v1412 = vsub.f32 %v1410, %v1411
      %v1413 = vand.u32 %v1412, 4294901760
      %1414 = vmatpush1.msra.mxu0 %v1413
      %1415 = vmatprep.subr.mxu0 0.0
      %v1416 = vand.u32 %v183, 4294901760
      %v1417 = vsub.f32 %v183, %v1416
      %v1418 = vand.u32 %v1417, 4294901760
      %v1419 = vsub.f32 %v1417, %v1418
      %v1420 = vand.u32 %v1419, 4294901760
      %1421 = vmatpush1.msra.mxu0 %v1420
      %1422 = vmatprep.subr.mxu0 0.0
      %1423 = vmatpush2.msra.mxu0 0.0
      %1424 = vmatprep.subr.mxu0 0.0
      %1425 = vmatpush2.msra.mxu0 0.0
      %1426 = vmatprep.subr.mxu0 0.0
      %1427 = vmatpush2.msra.mxu0 0.0
      %1428 = vmatprep.subr.mxu0 0.0
      %1429 = vmatpush2.msra.mxu0 0.0
      %1430 = vmatprep.subr.mxu0 0.0
      %1431 = vmatpush2.msra.mxu0 0.0
      %1432 = vmatprep.subr.mxu0 0.0
      %1433 = vmatpush2.msra.mxu0 0.0
      %1434 = vmatprep.subr.mxu0 0.0
      %1435 = vmatpush2.msra.mxu0 0.0
      %1436 = vmatprep.subr.mxu0 0.0
      %1437 = vmatpush2.msra.mxu0 0.0
      %1438 = vmatprep.subr.mxu0 0.0
      %1439 = vmatpush2.msra.mxu0 0.0
      %1440 = vmatprep.subr.mxu0 0.0
      %1441 = vmatpush2.msra.mxu0 0.0
      %1442 = vmatprep.subr.mxu0 0.0
      %1443 = vmatpush2.msra.mxu0 0.0
      %1444 = vmatprep.subr.mxu0 0.0
      %1445 = vmatpush2.msra.mxu0 0.0
      %1446 = vmatprep.subr.mxu0 0.0
      %1447 = vmatpush2.msra.mxu0 0.0
      %1448 = vmatprep.subr.mxu0 0.0
      %1449 = vmatpush2.msra.mxu0 0.0
      %1450 = vmatprep.subr.mxu0 0.0
      %1451 = vmatpush2.msra.mxu0 0.0
      %1452 = vmatprep.subr.mxu0 0.0
      %1453 = vmatpush2.msra.mxu0 0.0
      %1454 = vmatprep.mubr.f32.mxu0 0.0
      %v1455 = vand.u32 %v1141, 4294901760
      %1456 = vmatmul.mubr.f32.gmra.mxu0 %v1455
      %v1457 = vpop.f32.mrf.mxu0
      %v1458 = vadd.f32 %v1237, %v1457
      %v1459 = vpop.f32.mrf.mxu0
      %1460 = vmatprep.mubr.f32.mxu0 0.0
      %v1461 = vand.u32 %v1142, 4294901760
      %1462 = vmatmul.mubr.f32.gmra.mxu0 %v1461
      %v1463 = vpop.f32.mrf.mxu0
      %v1464 = vadd.f32 %v1247, %v1463
      %v1465 = vpop.f32.mrf.mxu0
      %1466 = vmatprep.mubr.f32.mxu0 0.0
      %v1467 = vand.u32 %v1143, 4294901760
      %1468 = vmatmul.mubr.f32.gmra.mxu0 %v1467
      %v1469 = vpop.f32.mrf.mxu0
      %v1470 = vadd.f32 %v1257, %v1469
      %v1471 = vpop.f32.mrf.mxu0
      %1472 = vmatprep.mubr.f32.mxu0 0.0
      %v1473 = vand.u32 %v1144, 4294901760
      %1474 = vmatmul.mubr.f32.gmra.mxu0 %v1473
      %v1475 = vpop.f32.mrf.mxu0
      %v1476 = vadd.f32 %v1267, %v1475
      %v1477 = vpop.f32.mrf.mxu0
      %1478 = vmatprep.mubr.f32.mxu0 0.0
      %v1479 = vand.u32 %v1145, 4294901760
      %1480 = vmatmul.mubr.f32.gmra.mxu0 %v1479
      %v1481 = vpop.f32.mrf.mxu0
      %v1482 = vadd.f32 %v1277, %v1481
      %v1483 = vpop.f32.mrf.mxu0
      %1484 = vmatprep.mubr.f32.mxu0 0.0
      %v1485 = vand.u32 %v1146, 4294901760
      %1486 = vmatmul.mubr.f32.gmra.mxu0 %v1485
      %v1487 = vpop.f32.mrf.mxu0
      %v1488 = vadd.f32 %v1287, %v1487
      %v1489 = vpop.f32.mrf.mxu0
      %1490 = vmatprep.mubr.f32.mxu0 0.0
      %v1491 = vand.u32 %v1147, 4294901760
      %1492 = vmatmul.mubr.f32.gmra.mxu0 %v1491
      %v1493 = vpop.f32.mrf.mxu0
      %v1494 = vadd.f32 %v1297, %v1493
      %v1495 = vpop.f32.mrf.mxu0
      %1496 = vmatprep.mubr.f32.mxu0 0.0
      %v1497 = vand.u32 %v1148, 4294901760
      %1498 = vmatmul.mubr.f32.gmra.mxu0 %v1497
      %v1499 = vpop.f32.mrf.mxu0
      %v1500 = vadd.f32 %v1307, %v1499
      %v1501 = vpop.f32.mrf.mxu0
      %1502 = vdwg.mxu0
      %1503 = vmatprep.subr.mxu0 0.0
      %v1504 = vand.u32 %v198, 4294901760
      %v1505 = vsub.f32 %v198, %v1504
      %1506 = vmatpush1.msra.mxu0 %v1505
      %1507 = vmatprep.subr.mxu0 0.0
      %v1508 = vand.u32 %v197, 4294901760
      %v1509 = vsub.f32 %v197, %v1508
      %1510 = vmatpush1.msra.mxu0 %v1509
      %1511 = vmatprep.subr.mxu0 0.0
      %v1512 = vand.u32 %v196, 4294901760
      %v1513 = vsub.f32 %v196, %v1512
      %1514 = vmatpush1.msra.mxu0 %v1513
      %1515 = vmatprep.subr.mxu0 0.0
      %v1516 = vand.u32 %v195, 4294901760
      %v1517 = vsub.f32 %v195, %v1516
      %1518 = vmatpush1.msra.mxu0 %v1517
      %1519 = vmatprep.subr.mxu0 0.0
      %v1520 = vand.u32 %v194, 4294901760
      %v1521 = vsub.f32 %v194, %v1520
      %1522 = vmatpush1.msra.mxu0 %v1521
      %1523 = vmatprep.subr.mxu0 0.0
      %v1524 = vand.u32 %v193, 4294901760
      %v1525 = vsub.f32 %v193, %v1524
      %1526 = vmatpush1.msra.mxu0 %v1525
      %1527 = vmatprep.subr.mxu0 0.0
      %v1528 = vand.u32 %v192, 4294901760
      %v1529 = vsub.f32 %v192, %v1528
      %1530 = vmatpush1.msra.mxu0 %v1529
      %1531 = vmatprep.subr.mxu0 0.0
      %v1532 = vand.u32 %v191, 4294901760
      %v1533 = vsub.f32 %v191, %v1532
      %1534 = vmatpush1.msra.mxu0 %v1533
      %1535 = vmatprep.subr.mxu0 0.0
      %v1536 = vand.u32 %v190, 4294901760
      %v1537 = vsub.f32 %v190, %v1536
      %1538 = vmatpush1.msra.mxu0 %v1537
      %1539 = vmatprep.subr.mxu0 0.0
      %v1540 = vand.u32 %v189, 4294901760
      %v1541 = vsub.f32 %v189, %v1540
      %1542 = vmatpush1.msra.mxu0 %v1541
      %1543 = vmatprep.subr.mxu0 0.0
      %v1544 = vand.u32 %v188, 4294901760
      %v1545 = vsub.f32 %v188, %v1544
      %1546 = vmatpush1.msra.mxu0 %v1545
      %1547 = vmatprep.subr.mxu0 0.0
      %v1548 = vand.u32 %v187, 4294901760
      %v1549 = vsub.f32 %v187, %v1548
      %1550 = vmatpush1.msra.mxu0 %v1549
      %1551 = vmatprep.subr.mxu0 0.0
      %v1552 = vand.u32 %v186, 4294901760
      %v1553 = vsub.f32 %v186, %v1552
      %1554 = vmatpush1.msra.mxu0 %v1553
      %1555 = vmatprep.subr.mxu0 0.0
      %v1556 = vand.u32 %v185, 4294901760
      %v1557 = vsub.f32 %v185, %v1556
      %1558 = vmatpush1.msra.mxu0 %v1557
      %1559 = vmatprep.subr.mxu0 0.0
      %v1560 = vand.u32 %v184, 4294901760
      %v1561 = vsub.f32 %v184, %v1560
      %1562 = vmatpush1.msra.mxu0 %v1561
      %1563 = vmatprep.subr.mxu0 0.0
      %v1564 = vand.u32 %v183, 4294901760
      %v1565 = vsub.f32 %v183, %v1564
      %1566 = vmatpush1.msra.mxu0 %v1565
      %1567 = vmatprep.subr.mxu0 0.0
      %1568 = vmatpush2.msra.mxu0 0.0
      %1569 = vmatprep.subr.mxu0 0.0
      %1570 = vmatpush2.msra.mxu0 0.0
      %1571 = vmatprep.subr.mxu0 0.0
      %1572 = vmatpush2.msra.mxu0 0.0
      %1573 = vmatprep.subr.mxu0 0.0
      %1574 = vmatpush2.msra.mxu0 0.0
      %1575 = vmatprep.subr.mxu0 0.0
      %1576 = vmatpush2.msra.mxu0 0.0
      %1577 = vmatprep.subr.mxu0 0.0
      %1578 = vmatpush2.msra.mxu0 0.0
      %1579 = vmatprep.subr.mxu0 0.0
      %1580 = vmatpush2.msra.mxu0 0.0
      %1581 = vmatprep.subr.mxu0 0.0
      %1582 = vmatpush2.msra.mxu0 0.0
      %1583 = vmatprep.subr.mxu0 0.0
      %1584 = vmatpush2.msra.mxu0 0.0
      %1585 = vmatprep.subr.mxu0 0.0
      %1586 = vmatpush2.msra.mxu0 0.0
      %1587 = vmatprep.subr.mxu0 0.0
      %1588 = vmatpush2.msra.mxu0 0.0
      %1589 = vmatprep.subr.mxu0 0.0
      %1590 = vmatpush2.msra.mxu0 0.0
      %1591 = vmatprep.subr.mxu0 0.0
      %1592 = vmatpush2.msra.mxu0 0.0
      %1593 = vmatprep.subr.mxu0 0.0
      %1594 = vmatpush2.msra.mxu0 0.0
      %1595 = vmatprep.subr.mxu0 0.0
      %1596 = vmatpush2.msra.mxu0 0.0
      %1597 = vmatprep.subr.mxu0 0.0
      %1598 = vmatpush2.msra.mxu0 0.0
      %1599 = vmatprep.mubr.f32.mxu0 0.0
      %v1600 = vand.u32 %v1141, 4294901760
      %v1601 = vsub.f32 %v1141, %v1600
      %1602 = vmatmul.mubr.f32.gmra.mxu0 %v1601
      %v1603 = vpop.f32.mrf.mxu0
      %v1604 = vadd.f32 %v1458, %v1603
      %v1605 = vpop.f32.mrf.mxu0
      %1606 = vmatprep.mubr.f32.mxu0 0.0
      %v1607 = vand.u32 %v1142, 4294901760
      %v1608 = vsub.f32 %v1142, %v1607
      %1609 = vmatmul.mubr.f32.gmra.mxu0 %v1608
      %v1610 = vpop.f32.mrf.mxu0
      %v1611 = vadd.f32 %v1464, %v1610
      %v1612 = vpop.f32.mrf.mxu0
      %1613 = vmatprep.mubr.f32.mxu0 0.0
      %v1614 = vand.u32 %v1143, 4294901760
      %v1615 = vsub.f32 %v1143, %v1614
      %1616 = vmatmul.mubr.f32.gmra.mxu0 %v1615
      %v1617 = vpop.f32.mrf.mxu0
      %v1618 = vadd.f32 %v1470, %v1617
      %v1619 = vpop.f32.mrf.mxu0
      %1620 = vmatprep.mubr.f32.mxu0 0.0
      %v1621 = vand.u32 %v1144, 4294901760
      %v1622 = vsub.f32 %v1144, %v1621
      %1623 = vmatmul.mubr.f32.gmra.mxu0 %v1622
      %v1624 = vpop.f32.mrf.mxu0
      %v1625 = vadd.f32 %v1476, %v1624
      %v1626 = vpop.f32.mrf.mxu0
      %1627 = vmatprep.mubr.f32.mxu0 0.0
      %v1628 = vand.u32 %v1145, 4294901760
      %v1629 = vsub.f32 %v1145, %v1628
      %1630 = vmatmul.mubr.f32.gmra.mxu0 %v1629
      %v1631 = vpop.f32.mrf.mxu0
      %v1632 = vadd.f32 %v1482, %v1631
      %v1633 = vpop.f32.mrf.mxu0
      %1634 = vmatprep.mubr.f32.mxu0 0.0
      %v1635 = vand.u32 %v1146, 4294901760
      %v1636 = vsub.f32 %v1146, %v1635
      %1637 = vmatmul.mubr.f32.gmra.mxu0 %v1636
      %v1638 = vpop.f32.mrf.mxu0
      %v1639 = vadd.f32 %v1488, %v1638
      %v1640 = vpop.f32.mrf.mxu0
      %1641 = vmatprep.mubr.f32.mxu0 0.0
      %v1642 = vand.u32 %v1147, 4294901760
      %v1643 = vsub.f32 %v1147, %v1642
      %1644 = vmatmul.mubr.f32.gmra.mxu0 %v1643
      %v1645 = vpop.f32.mrf.mxu0
      %v1646 = vadd.f32 %v1494, %v1645
      %v1647 = vpop.f32.mrf.mxu0
      %1648 = vmatprep.mubr.f32.mxu0 0.0
      %v1649 = vand.u32 %v1148, 4294901760
      %v1650 = vsub.f32 %v1148, %v1649
      %1651 = vmatmul.mubr.f32.gmra.mxu0 %v1650
      %v1652 = vpop.f32.mrf.mxu0
      %v1653 = vadd.f32 %v1500, %v1652
      %v1654 = vpop.f32.mrf.mxu0
      %1655 = vdwg.mxu0
      %1656 = vmatprep.subr.mxu0 0.0
      %v1657 = vand.u32 %v198, 4294901760
      %1658 = vmatpush1.msra.mxu0 %v1657
      %1659 = vmatprep.subr.mxu0 0.0
      %v1660 = vand.u32 %v197, 4294901760
      %1661 = vmatpush1.msra.mxu0 %v1660
      %1662 = vmatprep.subr.mxu0 0.0
      %v1663 = vand.u32 %v196, 4294901760
      %1664 = vmatpush1.msra.mxu0 %v1663
      %1665 = vmatprep.subr.mxu0 0.0
      %v1666 = vand.u32 %v195, 4294901760
      %1667 = vmatpush1.msra.mxu0 %v1666
      %1668 = vmatprep.subr.mxu0 0.0
      %v1669 = vand.u32 %v194, 4294901760
      %1670 = vmatpush1.msra.mxu0 %v1669
      %1671 = vmatprep.subr.mxu0 0.0
      %v1672 = vand.u32 %v193, 4294901760
      %1673 = vmatpush1.msra.mxu0 %v1672
      %1674 = vmatprep.subr.mxu0 0.0
      %v1675 = vand.u32 %v192, 4294901760
      %1676 = vmatpush1.msra.mxu0 %v1675
      %1677 = vmatprep.subr.mxu0 0.0
      %v1678 = vand.u32 %v191, 4294901760
      %1679 = vmatpush1.msra.mxu0 %v1678
      %1680 = vmatprep.subr.mxu0 0.0
      %v1681 = vand.u32 %v190, 4294901760
      %1682 = vmatpush1.msra.mxu0 %v1681
      %1683 = vmatprep.subr.mxu0 0.0
      %v1684 = vand.u32 %v189, 4294901760
      %1685 = vmatpush1.msra.mxu0 %v1684
      %1686 = vmatprep.subr.mxu0 0.0
      %v1687 = vand.u32 %v188, 4294901760
      %1688 = vmatpush1.msra.mxu0 %v1687
      %1689 = vmatprep.subr.mxu0 0.0
      %v1690 = vand.u32 %v187, 4294901760
      %1691 = vmatpush1.msra.mxu0 %v1690
      %1692 = vmatprep.subr.mxu0 0.0
      %v1693 = vand.u32 %v186, 4294901760
      %1694 = vmatpush1.msra.mxu0 %v1693
      %1695 = vmatprep.subr.mxu0 0.0
      %v1696 = vand.u32 %v185, 4294901760
      %1697 = vmatpush1.msra.mxu0 %v1696
      %1698 = vmatprep.subr.mxu0 0.0
      %v1699 = vand.u32 %v184, 4294901760
      %1700 = vmatpush1.msra.mxu0 %v1699
      %1701 = vmatprep.subr.mxu0 0.0
      %v1702 = vand.u32 %v183, 4294901760
      %1703 = vmatpush1.msra.mxu0 %v1702
      %1704 = vmatprep.subr.mxu0 0.0
      %1705 = vmatpush2.msra.mxu0 0.0
      %1706 = vmatprep.subr.mxu0 0.0
      %1707 = vmatpush2.msra.mxu0 0.0
      %1708 = vmatprep.subr.mxu0 0.0
      %1709 = vmatpush2.msra.mxu0 0.0
      %1710 = vmatprep.subr.mxu0 0.0
      %1711 = vmatpush2.msra.mxu0 0.0
      %1712 = vmatprep.subr.mxu0 0.0
      %1713 = vmatpush2.msra.mxu0 0.0
      %1714 = vmatprep.subr.mxu0 0.0
      %1715 = vmatpush2.msra.mxu0 0.0
      %1716 = vmatprep.subr.mxu0 0.0
      %1717 = vmatpush2.msra.mxu0 0.0
      %1718 = vmatprep.subr.mxu0 0.0
      %1719 = vmatpush2.msra.mxu0 0.0
      %1720 = vmatprep.subr.mxu0 0.0
      %1721 = vmatpush2.msra.mxu0 0.0
      %1722 = vmatprep.subr.mxu0 0.0
      %1723 = vmatpush2.msra.mxu0 0.0
      %1724 = vmatprep.subr.mxu0 0.0
      %1725 = vmatpush2.msra.mxu0 0.0
      %1726 = vmatprep.subr.mxu0 0.0
      %1727 = vmatpush2.msra.mxu0 0.0
      %1728 = vmatprep.subr.mxu0 0.0
      %1729 = vmatpush2.msra.mxu0 0.0
      %1730 = vmatprep.subr.mxu0 0.0
      %1731 = vmatpush2.msra.mxu0 0.0
      %1732 = vmatprep.subr.mxu0 0.0
      %1733 = vmatpush2.msra.mxu0 0.0
      %1734 = vmatprep.subr.mxu0 0.0
      %1735 = vmatpush2.msra.mxu0 0.0
      %1736 = vmatprep.mubr.f32.mxu0 0.0
      %v1737 = vand.u32 %v1141, 4294901760
      %v1738 = vsub.f32 %v1141, %v1737
      %v1739 = vand.u32 %v1738, 4294901760
      %1740 = vmatmul.mubr.f32.gmra.mxu0 %v1739
      %v1741 = vpop.f32.mrf.mxu0
      %v1742 = vadd.f32 %v1604, %v1741
      %v1743 = vpop.f32.mrf.mxu0
      %1744 = vmatprep.mubr.f32.mxu0 0.0
      %v1745 = vand.u32 %v1142, 4294901760
      %v1746 = vsub.f32 %v1142, %v1745
      %v1747 = vand.u32 %v1746, 4294901760
      %1748 = vmatmul.mubr.f32.gmra.mxu0 %v1747
      %v1749 = vpop.f32.mrf.mxu0
      %v1750 = vadd.f32 %v1611, %v1749
      %v1751 = vpop.f32.mrf.mxu0
      %1752 = vmatprep.mubr.f32.mxu0 0.0
      %v1753 = vand.u32 %v1143, 4294901760
      %v1754 = vsub.f32 %v1143, %v1753
      %v1755 = vand.u32 %v1754, 4294901760
      %1756 = vmatmul.mubr.f32.gmra.mxu0 %v1755
      %v1757 = vpop.f32.mrf.mxu0
      %v1758 = vadd.f32 %v1618, %v1757
      %v1759 = vpop.f32.mrf.mxu0
      %1760 = vmatprep.mubr.f32.mxu0 0.0
      %v1761 = vand.u32 %v1144, 4294901760
      %v1762 = vsub.f32 %v1144, %v1761
      %v1763 = vand.u32 %v1762, 4294901760
      %1764 = vmatmul.mubr.f32.gmra.mxu0 %v1763
      %v1765 = vpop.f32.mrf.mxu0
      %v1766 = vadd.f32 %v1625, %v1765
      %v1767 = vpop.f32.mrf.mxu0
      %1768 = vmatprep.mubr.f32.mxu0 0.0
      %v1769 = vand.u32 %v1145, 4294901760
      %v1770 = vsub.f32 %v1145, %v1769
      %v1771 = vand.u32 %v1770, 4294901760
      %1772 = vmatmul.mubr.f32.gmra.mxu0 %v1771
      %v1773 = vpop.f32.mrf.mxu0
      %v1774 = vadd.f32 %v1632, %v1773
      %v1775 = vpop.f32.mrf.mxu0
      %1776 = vmatprep.mubr.f32.mxu0 0.0
      %v1777 = vand.u32 %v1146, 4294901760
      %v1778 = vsub.f32 %v1146, %v1777
      %v1779 = vand.u32 %v1778, 4294901760
      %1780 = vmatmul.mubr.f32.gmra.mxu0 %v1779
      %v1781 = vpop.f32.mrf.mxu0
      %v1782 = vadd.f32 %v1639, %v1781
      %v1783 = vpop.f32.mrf.mxu0
      %1784 = vmatprep.mubr.f32.mxu0 0.0
      %v1785 = vand.u32 %v1147, 4294901760
      %v1786 = vsub.f32 %v1147, %v1785
      %v1787 = vand.u32 %v1786, 4294901760
      %1788 = vmatmul.mubr.f32.gmra.mxu0 %v1787
      %v1789 = vpop.f32.mrf.mxu0
      %v1790 = vadd.f32 %v1646, %v1789
      %v1791 = vpop.f32.mrf.mxu0
      %1792 = vmatprep.mubr.f32.mxu0 0.0
      %v1793 = vand.u32 %v1148, 4294901760
      %v1794 = vsub.f32 %v1148, %v1793
      %v1795 = vand.u32 %v1794, 4294901760
      %1796 = vmatmul.mubr.f32.gmra.mxu0 %v1795
      %v1797 = vpop.f32.mrf.mxu0
      %v1798 = vadd.f32 %v1653, %v1797
      %v1799 = vpop.f32.mrf.mxu0
      %1800 = vdwg.mxu0
      %1801 = vmatprep.subr.mxu0 0.0
      %v1802 = vand.u32 %v198, 4294901760
      %v1803 = vsub.f32 %v198, %v1802
      %v1804 = vand.u32 %v1803, 4294901760
      %1805 = vmatpush1.msra.mxu0 %v1804
      %1806 = vmatprep.subr.mxu0 0.0
      %v1807 = vand.u32 %v197, 4294901760
      %v1808 = vsub.f32 %v197, %v1807
      %v1809 = vand.u32 %v1808, 4294901760
      %1810 = vmatpush1.msra.mxu0 %v1809
      %1811 = vmatprep.subr.mxu0 0.0
      %v1812 = vand.u32 %v196, 4294901760
      %v1813 = vsub.f32 %v196, %v1812
      %v1814 = vand.u32 %v1813, 4294901760
      %1815 = vmatpush1.msra.mxu0 %v1814
      %1816 = vmatprep.subr.mxu0 0.0
      %v1817 = vand.u32 %v195, 4294901760
      %v1818 = vsub.f32 %v195, %v1817
      %v1819 = vand.u32 %v1818, 4294901760
      %1820 = vmatpush1.msra.mxu0 %v1819
      %1821 = vmatprep.subr.mxu0 0.0
      %v1822 = vand.u32 %v194, 4294901760
      %v1823 = vsub.f32 %v194, %v1822
      %v1824 = vand.u32 %v1823, 4294901760
      %1825 = vmatpush1.msra.mxu0 %v1824
      %1826 = vmatprep.subr.mxu0 0.0
      %v1827 = vand.u32 %v193, 4294901760
      %v1828 = vsub.f32 %v193, %v1827
      %v1829 = vand.u32 %v1828, 4294901760
      %1830 = vmatpush1.msra.mxu0 %v1829
      %1831 = vmatprep.subr.mxu0 0.0
      %v1832 = vand.u32 %v192, 4294901760
      %v1833 = vsub.f32 %v192, %v1832
      %v1834 = vand.u32 %v1833, 4294901760
      %1835 = vmatpush1.msra.mxu0 %v1834
      %1836 = vmatprep.subr.mxu0 0.0
      %v1837 = vand.u32 %v191, 4294901760
      %v1838 = vsub.f32 %v191, %v1837
      %v1839 = vand.u32 %v1838, 4294901760
      %1840 = vmatpush1.msra.mxu0 %v1839
      %1841 = vmatprep.subr.mxu0 0.0
      %v1842 = vand.u32 %v190, 4294901760
      %v1843 = vsub.f32 %v190, %v1842
      %v1844 = vand.u32 %v1843, 4294901760
      %1845 = vmatpush1.msra.mxu0 %v1844
      %1846 = vmatprep.subr.mxu0 0.0
      %v1847 = vand.u32 %v189, 4294901760
      %v1848 = vsub.f32 %v189, %v1847
      %v1849 = vand.u32 %v1848, 4294901760
      %1850 = vmatpush1.msra.mxu0 %v1849
      %1851 = vmatprep.subr.mxu0 0.0
      %v1852 = vand.u32 %v188, 4294901760
      %v1853 = vsub.f32 %v188, %v1852
      %v1854 = vand.u32 %v1853, 4294901760
      %1855 = vmatpush1.msra.mxu0 %v1854
      %1856 = vmatprep.subr.mxu0 0.0
      %v1857 = vand.u32 %v187, 4294901760
      %v1858 = vsub.f32 %v187, %v1857
      %v1859 = vand.u32 %v1858, 4294901760
      %1860 = vmatpush1.msra.mxu0 %v1859
      %1861 = vmatprep.subr.mxu0 0.0
      %v1862 = vand.u32 %v186, 4294901760
      %v1863 = vsub.f32 %v186, %v1862
      %v1864 = vand.u32 %v1863, 4294901760
      %1865 = vmatpush1.msra.mxu0 %v1864
      %1866 = vmatprep.subr.mxu0 0.0
      %v1867 = vand.u32 %v185, 4294901760
      %v1868 = vsub.f32 %v185, %v1867
      %v1869 = vand.u32 %v1868, 4294901760
      %1870 = vmatpush1.msra.mxu0 %v1869
      %1871 = vmatprep.subr.mxu0 0.0
      %v1872 = vand.u32 %v184, 4294901760
      %v1873 = vsub.f32 %v184, %v1872
      %v1874 = vand.u32 %v1873, 4294901760
      %1875 = vmatpush1.msra.mxu0 %v1874
      %1876 = vmatprep.subr.mxu0 0.0
      %v1877 = vand.u32 %v183, 4294901760
      %v1878 = vsub.f32 %v183, %v1877
      %v1879 = vand.u32 %v1878, 4294901760
      %1880 = vmatpush1.msra.mxu0 %v1879
      %1881 = vmatprep.subr.mxu0 0.0
      %1882 = vmatpush2.msra.mxu0 0.0
      %1883 = vmatprep.subr.mxu0 0.0
      %1884 = vmatpush2.msra.mxu0 0.0
      %1885 = vmatprep.subr.mxu0 0.0
      %1886 = vmatpush2.msra.mxu0 0.0
      %1887 = vmatprep.subr.mxu0 0.0
      %1888 = vmatpush2.msra.mxu0 0.0
      %1889 = vmatprep.subr.mxu0 0.0
      %1890 = vmatpush2.msra.mxu0 0.0
      %1891 = vmatprep.subr.mxu0 0.0
      %1892 = vmatpush2.msra.mxu0 0.0
      %1893 = vmatprep.subr.mxu0 0.0
      %1894 = vmatpush2.msra.mxu0 0.0
      %1895 = vmatprep.subr.mxu0 0.0
      %1896 = vmatpush2.msra.mxu0 0.0
      %1897 = vmatprep.subr.mxu0 0.0
      %1898 = vmatpush2.msra.mxu0 0.0
      %1899 = vmatprep.subr.mxu0 0.0
      %1900 = vmatpush2.msra.mxu0 0.0
      %1901 = vmatprep.subr.mxu0 0.0
      %1902 = vmatpush2.msra.mxu0 0.0
      %1903 = vmatprep.subr.mxu0 0.0
      %1904 = vmatpush2.msra.mxu0 0.0
      %1905 = vmatprep.subr.mxu0 0.0
      %1906 = vmatpush2.msra.mxu0 0.0
      %1907 = vmatprep.subr.mxu0 0.0
      %1908 = vmatpush2.msra.mxu0 0.0
      %1909 = vmatprep.subr.mxu0 0.0
      %1910 = vmatpush2.msra.mxu0 0.0
      %1911 = vmatprep.subr.mxu0 0.0
      %1912 = vmatpush2.msra.mxu0 0.0
      %1913 = vmatprep.mubr.f32.mxu0 0.0
      %v1914 = vand.u32 %v1141, 4294901760
      %1915 = vmatmul.mubr.f32.gmra.mxu0 %v1914
      %v1916 = vpop.f32.mrf.mxu0
      %v1917 = vadd.f32 %v1742, %v1916
      %v1918 = vpop.f32.mrf.mxu0
      %1919 = vmatprep.mubr.f32.mxu0 0.0
      %v1920 = vand.u32 %v1142, 4294901760
      %1921 = vmatmul.mubr.f32.gmra.mxu0 %v1920
      %v1922 = vpop.f32.mrf.mxu0
      %v1923 = vadd.f32 %v1750, %v1922
      %v1924 = vpop.f32.mrf.mxu0
      %1925 = vmatprep.mubr.f32.mxu0 0.0
      %v1926 = vand.u32 %v1143, 4294901760
      %1927 = vmatmul.mubr.f32.gmra.mxu0 %v1926
      %v1928 = vpop.f32.mrf.mxu0
      %v1929 = vadd.f32 %v1758, %v1928
      %v1930 = vpop.f32.mrf.mxu0
      %1931 = vmatprep.mubr.f32.mxu0 0.0
      %v1932 = vand.u32 %v1144, 4294901760
      %1933 = vmatmul.mubr.f32.gmra.mxu0 %v1932
      %v1934 = vpop.f32.mrf.mxu0
      %v1935 = vadd.f32 %v1766, %v1934
      %v1936 = vpop.f32.mrf.mxu0
      %1937 = vmatprep.mubr.f32.mxu0 0.0
      %v1938 = vand.u32 %v1145, 4294901760
      %1939 = vmatmul.mubr.f32.gmra.mxu0 %v1938
      %v1940 = vpop.f32.mrf.mxu0
      %v1941 = vadd.f32 %v1774, %v1940
      %v1942 = vpop.f32.mrf.mxu0
      %1943 = vmatprep.mubr.f32.mxu0 0.0
      %v1944 = vand.u32 %v1146, 4294901760
      %1945 = vmatmul.mubr.f32.gmra.mxu0 %v1944
      %v1946 = vpop.f32.mrf.mxu0
      %v1947 = vadd.f32 %v1782, %v1946
      %v1948 = vpop.f32.mrf.mxu0
      %1949 = vmatprep.mubr.f32.mxu0 0.0
      %v1950 = vand.u32 %v1147, 4294901760
      %1951 = vmatmul.mubr.f32.gmra.mxu0 %v1950
      %v1952 = vpop.f32.mrf.mxu0
      %v1953 = vadd.f32 %v1790, %v1952
      %v1954 = vpop.f32.mrf.mxu0
      %1955 = vmatprep.mubr.f32.mxu0 0.0
      %v1956 = vand.u32 %v1148, 4294901760
      %1957 = vmatmul.mubr.f32.gmra.mxu0 %v1956
      %v1958 = vpop.f32.mrf.mxu0
      %v1959 = vadd.f32 %v1798, %v1958
      %v1960 = vpop.f32.mrf.mxu0
      %1961 = vdwg.mxu0
      %1962 = vmatprep.subr.mxu0 0.0
      %v1963 = vand.u32 %v198, 4294901760
      %1964 = vmatpush1.msra.mxu0 %v1963
      %1965 = vmatprep.subr.mxu0 0.0
      %v1966 = vand.u32 %v197, 4294901760
      %1967 = vmatpush1.msra.mxu0 %v1966
      %1968 = vmatprep.subr.mxu0 0.0
      %v1969 = vand.u32 %v196, 4294901760
      %1970 = vmatpush1.msra.mxu0 %v1969
      %1971 = vmatprep.subr.mxu0 0.0
      %v1972 = vand.u32 %v195, 4294901760
      %1973 = vmatpush1.msra.mxu0 %v1972
      %1974 = vmatprep.subr.mxu0 0.0
      %v1975 = vand.u32 %v194, 4294901760
      %1976 = vmatpush1.msra.mxu0 %v1975
      %1977 = vmatprep.subr.mxu0 0.0
      %v1978 = vand.u32 %v193, 4294901760
      %1979 = vmatpush1.msra.mxu0 %v1978
      %1980 = vmatprep.subr.mxu0 0.0
      %v1981 = vand.u32 %v192, 4294901760
      %1982 = vmatpush1.msra.mxu0 %v1981
      %1983 = vmatprep.subr.mxu0 0.0
      %v1984 = vand.u32 %v191, 4294901760
      %1985 = vmatpush1.msra.mxu0 %v1984
      %1986 = vmatprep.subr.mxu0 0.0
      %v1987 = vand.u32 %v190, 4294901760
      %1988 = vmatpush1.msra.mxu0 %v1987
      %1989 = vmatprep.subr.mxu0 0.0
      %v1990 = vand.u32 %v189, 4294901760
      %1991 = vmatpush1.msra.mxu0 %v1990
      %1992 = vmatprep.subr.mxu0 0.0
      %v1993 = vand.u32 %v188, 4294901760
      %1994 = vmatpush1.msra.mxu0 %v1993
      %1995 = vmatprep.subr.mxu0 0.0
      %v1996 = vand.u32 %v187, 4294901760
      %1997 = vmatpush1.msra.mxu0 %v1996
      %1998 = vmatprep.subr.mxu0 0.0
      %v1999 = vand.u32 %v186, 4294901760
      %2000 = vmatpush1.msra.mxu0 %v1999
      %2001 = vmatprep.subr.mxu0 0.0
      %v2002 = vand.u32 %v185, 4294901760
      %2003 = vmatpush1.msra.mxu0 %v2002
      %2004 = vmatprep.subr.mxu0 0.0
      %v2005 = vand.u32 %v184, 4294901760
      %2006 = vmatpush1.msra.mxu0 %v2005
      %2007 = vmatprep.subr.mxu0 0.0
      %v2008 = vand.u32 %v183, 4294901760
      %2009 = vmatpush1.msra.mxu0 %v2008
      %2010 = vmatprep.subr.mxu0 0.0
      %2011 = vmatpush2.msra.mxu0 0.0
      %2012 = vmatprep.subr.mxu0 0.0
      %2013 = vmatpush2.msra.mxu0 0.0
      %2014 = vmatprep.subr.mxu0 0.0
      %2015 = vmatpush2.msra.mxu0 0.0
      %2016 = vmatprep.subr.mxu0 0.0
      %2017 = vmatpush2.msra.mxu0 0.0
      %2018 = vmatprep.subr.mxu0 0.0
      %2019 = vmatpush2.msra.mxu0 0.0
      %2020 = vmatprep.subr.mxu0 0.0
      %2021 = vmatpush2.msra.mxu0 0.0
      %2022 = vmatprep.subr.mxu0 0.0
      %2023 = vmatpush2.msra.mxu0 0.0
      %2024 = vmatprep.subr.mxu0 0.0
      %2025 = vmatpush2.msra.mxu0 0.0
      %2026 = vmatprep.subr.mxu0 0.0
      %2027 = vmatpush2.msra.mxu0 0.0
      %2028 = vmatprep.subr.mxu0 0.0
      %2029 = vmatpush2.msra.mxu0 0.0
      %2030 = vmatprep.subr.mxu0 0.0
      %2031 = vmatpush2.msra.mxu0 0.0
      %2032 = vmatprep.subr.mxu0 0.0
      %2033 = vmatpush2.msra.mxu0 0.0
      %2034 = vmatprep.subr.mxu0 0.0
      %2035 = vmatpush2.msra.mxu0 0.0
      %2036 = vmatprep.subr.mxu0 0.0
      %2037 = vmatpush2.msra.mxu0 0.0
      %2038 = vmatprep.subr.mxu0 0.0
      %2039 = vmatpush2.msra.mxu0 0.0
      %2040 = vmatprep.subr.mxu0 0.0
      %2041 = vmatpush2.msra.mxu0 0.0
      %2042 = vmatprep.mubr.f32.mxu0 0.0
      %v2043 = vand.u32 %v1141, 4294901760
      %2044 = vmatmul.mubr.f32.gmra.mxu0 %v2043
      %v2045 = vpop.f32.mrf.mxu0
      %v2046 = vadd.f32 %v1917, %v2045
      %v2047 = vpop.f32.mrf.mxu0
      %2048 = vmatprep.mubr.f32.mxu0 0.0
      %v2049 = vand.u32 %v1142, 4294901760
      %2050 = vmatmul.mubr.f32.gmra.mxu0 %v2049
      %v2051 = vpop.f32.mrf.mxu0
      %v2052 = vadd.f32 %v1923, %v2051
      %v2053 = vpop.f32.mrf.mxu0
      %2054 = vmatprep.mubr.f32.mxu0 0.0
      %v2055 = vand.u32 %v1143, 4294901760
      %2056 = vmatmul.mubr.f32.gmra.mxu0 %v2055
      %v2057 = vpop.f32.mrf.mxu0
      %v2058 = vadd.f32 %v1929, %v2057
      %v2059 = vpop.f32.mrf.mxu0
      %2060 = vmatprep.mubr.f32.mxu0 0.0
      %v2061 = vand.u32 %v1144, 4294901760
      %2062 = vmatmul.mubr.f32.gmra.mxu0 %v2061
      %v2063 = vpop.f32.mrf.mxu0
      %v2064 = vadd.f32 %v1935, %v2063
      %v2065 = vpop.f32.mrf.mxu0
      %2066 = vmatprep.mubr.f32.mxu0 0.0
      %v2067 = vand.u32 %v1145, 4294901760
      %2068 = vmatmul.mubr.f32.gmra.mxu0 %v2067
      %v2069 = vpop.f32.mrf.mxu0
      %v2070 = vadd.f32 %v1941, %v2069
      %v2071 = vpop.f32.mrf.mxu0
      %2072 = vmatprep.mubr.f32.mxu0 0.0
      %v2073 = vand.u32 %v1146, 4294901760
      %2074 = vmatmul.mubr.f32.gmra.mxu0 %v2073
      %v2075 = vpop.f32.mrf.mxu0
      %v2076 = vadd.f32 %v1947, %v2075
      %v2077 = vpop.f32.mrf.mxu0
      %2078 = vmatprep.mubr.f32.mxu0 0.0
      %v2079 = vand.u32 %v1147, 4294901760
      %2080 = vmatmul.mubr.f32.gmra.mxu0 %v2079
      %v2081 = vpop.f32.mrf.mxu0
      %v2082 = vadd.f32 %v1953, %v2081
      %v2083 = vpop.f32.mrf.mxu0
      %2084 = vmatprep.mubr.f32.mxu0 0.0
      %v2085 = vand.u32 %v1148, 4294901760
      %2086 = vmatmul.mubr.f32.gmra.mxu0 %v2085
      %v2087 = vpop.f32.mrf.mxu0
      %v2088 = vadd.f32 %v1959, %v2087
      %v2089 = vpop.f32.mrf.mxu0
      %2090 = vdwg.mxu0
      %v2091 = vmul.f32 %v1096, 0.03125
      %v2092 = vmul.f32 %v1102, 0.03125
      %v2093 = vmul.f32 %v1108, 0.03125
      %v2094 = vmul.f32 %v1114, 0.03125
      %v2095 = vmul.f32 %v1120, 0.03125
      %v2096 = vmul.f32 %v1126, 0.03125
      %v2097 = vmul.f32 %v1132, 0.03125
      %v2098 = vmul.f32 %v1138, 0.03125
      %v2099 = vmul.f32 %v2046, 0.03125
      %v2100 = vmul.f32 %v2052, 0.03125
      %v2101 = vmul.f32 %v2058, 0.03125
      %v2102 = vmul.f32 %v2064, 0.03125
      %v2103 = vmul.f32 %v2070, 0.03125
      %v2104 = vmul.f32 %v2076, 0.03125
      %v2105 = vmul.f32 %v2082, 0.03125
      %v2106 = vmul.f32 %v2088, 0.03125
      %v2107 = vmul.f32 %v2091, %v2091
      %v2108 = vmul.f32 %v2092, %v2092
      %v2109 = vmul.f32 %v2093, %v2093
      %v2110 = vmul.f32 %v2094, %v2094
      %v2111 = vmul.f32 %v2095, %v2095
      %v2112 = vmul.f32 %v2096, %v2096
      %v2113 = vmul.f32 %v2097, %v2097
      %v2114 = vmul.f32 %v2098, %v2098
      %v2115 = vsub.f32 %v2099, %v2107
      %v2116 = vsub.f32 %v2100, %v2108
      %v2117 = vsub.f32 %v2101, %v2109
      %v2118 = vsub.f32 %v2102, %v2110
      %v2119 = vsub.f32 %v2103, %v2111
      %v2120 = vsub.f32 %v2104, %v2112
      %v2121 = vsub.f32 %v2105, %v2113
      %v2122 = vsub.f32 %v2106, %v2114
      %v2123 = vmax.f32 %v2115, 0.0
      %v2124 = vmax.f32 %v2116, 0.0
      %v2125 = vmax.f32 %v2117, 0.0
      %v2126 = vmax.f32 %v2118, 0.0
      %v2127 = vmax.f32 %v2119, 0.0
      %v2128 = vmax.f32 %v2120, 0.0
      %v2129 = vmax.f32 %v2121, 0.0
      %v2130 = vmax.f32 %v2122, 0.0
      %v2131 = vadd.f32 %v2123, 1e-05
      %v2132 = vadd.f32 %v2124, 1e-05
      %v2133 = vadd.f32 %v2125, 1e-05
      %v2134 = vadd.f32 %v2126, 1e-05
      %v2135 = vadd.f32 %v2127, 1e-05
      %v2136 = vadd.f32 %v2128, 1e-05
      %v2137 = vadd.f32 %v2129, 1e-05
      %v2138 = vadd.f32 %v2130, 1e-05
      %v2139 = vrsqrt.pop %v2131
      %v2140 = vrsqrt.pop %v2132
      %v2141 = vrsqrt.pop %v2133
      %v2142 = vrsqrt.pop %v2134
      %v2143 = vrsqrt.pop %v2135
      %v2144 = vrsqrt.pop %v2136
      %v2145 = vrsqrt.pop %v2137
      %v2146 = vrsqrt.pop %v2138
      %v2147 = vmul.f32 %v174, %v2139
      %v2148 = vmul.f32 %v175, %v2140
      %v2149 = vmul.f32 %v176, %v2141
      %v2150 = vmul.f32 %v177, %v2142
      %v2151 = vmul.f32 %v178, %v2143
      %v2152 = vmul.f32 %v179, %v2144
      %v2153 = vmul.f32 %v180, %v2145
      %v2154 = vmul.f32 %v181, %v2146
      %v2156 = vlaneseq
      %v2157 = vshrl.u32 %v2156, 7
      %v2158 = vsub.s32 0, %v2157
      %v2159 = vrot.slane %v182, %v2158
      %v2161 = vmul.f32 %v2147, %v2159
      %v2162 = vmul.f32 %v2148, %v2159
      %v2163 = vmul.f32 %v2149, %v2159
      %v2164 = vmul.f32 %v2150, %v2159
      %v2165 = vmul.f32 %v2151, %v2159
      %v2166 = vmul.f32 %v2152, %v2159
      %v2167 = vmul.f32 %v2153, %v2159
      %v2168 = vmul.f32 %v2154, %v2159
      %2169 = vst [vmem:[%s172] sm:$0xff] %v2161
      %2170 = vst [vmem:[%s172 + $0x8] sm:$0xff] %v2162
      %2171 = vst [vmem:[%s172 + $0x10] sm:$0xff] %v2163
      %2172 = vst [vmem:[%s172 + $0x18] sm:$0xff] %v2164
      %2173 = vst [vmem:[%s172 + $0x20] sm:$0xff] %v2165
      %2174 = vst [vmem:[%s172 + $0x28] sm:$0xff] %v2166
      %2175 = vst [vmem:[%s172 + $0x30] sm:$0xff] %v2167
      %2176 = vst [vmem:[%s172 + $0x38] sm:$0xff] %v2168
      %s2177 = smul.u32 8, %s14
      %p2178 = scmp.lt.s32.totalorder %s2177, 15
      %s2179 = scalar_select %p2178, %s2177, 15
      %s2180 = smul.addr %s2179, 8
      %s2181 = scalar_lea.vmem %s3, %s2180
      // Predicated region
      $region33: #{biasfree_layernorm.1} parent=31 // pred_check
        %p2182 = pneg %p100
      $region34: #{biasfree_layernorm.1} parent=31 // pred_check_branch
        %2184 = sbr.rel (%p2182) target = $region36
      $region35: #{biasfree_layernorm.1} parent=31 // pred_region
        %s2185 = smul.u32 8, %s14
      $region36: #{biasfree_layernorm.1} parent=31 // pred_fallthru
        _
    $region32: #{biasfree_layernorm.1} parent=5 // pred_fallthru
      _
    %p2186 = scmp.le.s32.totalorder 2, %s9
    // Predicated region
    $region37: #{biasfree_layernorm.1} parent=5 // pred_check
      %p2187 = pneg %p2186
    $region38: #{biasfree_layernorm.1} parent=5 // pred_check_branch
      %2189 = sbr.rel (%p2187) target = $region40
    $region39: #{biasfree_layernorm.1} parent=5 // pred_region
      %s2190 = ssub.s32 %s9, 2
      // Predicated region
      $region41: #{biasfree_layernorm.1} parent=39 // pred_check
        %p2191 = pneg %p106
      $region42: #{biasfree_layernorm.1} parent=39 // pred_check_branch
        %2193 = sbr.rel (%p2191) target = $region44
      $region43: #{biasfree_layernorm.1} parent=39 // pred_region
        %s2194 = smul.u32 8, %s15
        %p2195 = scmp.lt.s32.totalorder %s2194, 15
        %s2196 = scalar_select %p2195, %s2194, 15
        %s2197 = smul.addr %s2196, 8
        %s2198 = scalar_lea.vmem %s3, %s2197
      $region44: #{biasfree_layernorm.1} parent=39 // pred_fallthru
        _
    $region40: #{biasfree_layernorm.1} parent=5 // pred_fallthru
      _
  $region6: #{biasfree_layernorm.1} parent=0 // loop_footer
    %s13 = sadd.s32 1, %s9
  $region7: #{biasfree_layernorm.1} parent=0 // loop_footer_branch
    %8 = sbr.rel target = $region3
  $region8: #{biasfree_layernorm.1} parent=0 // loop_exit
    _

</llo_original>
